<compile_context>
chip_gen: v6e
topology: v6e:2x2x1
jax: 0.10.0
libtpu: 0.0.40
codegen_flags: <defaults>
</compile_context>

<pallas_src>
import functools

import jax
import jax.numpy as jnp
from jax.experimental import pallas as pl
from jax.experimental.pallas import tpu as pltpu

# hparams (small, consistent with the module's structure)
N_MEL_CHANNELS = 16          # hparams.n_mel_channels
POSTNET_EMBEDDING_DIM = 32   # hparams.postnet_embedding_dim
POSTNET_KERNEL_SIZE = 5      # hparams.postnet_kernel_size
POSTNET_N_CONVOLUTIONS = 5   # hparams.postnet_n_convolutions
PAD = (POSTNET_KERNEL_SIZE - 1) // 2
BN_EPS = 1e-5
C_MAX = max(N_MEL_CHANNELS, POSTNET_EMBEDDING_DIM)
LANE = 128
HALO = 128                   # lane-aligned left halo -> unmasked interior stores


def postnet_fused_kernel(*refs, n_layers, pad, t_real):
    """Fused 5-layer conv+BN(+tanh) stack for one batch element.

    refs layout:
      refs[0]                 x_ref   (1, Cmel, Tp)          f32 input, (C, T) layout
      refs[1 + 2*l]           w_ref_l (Cout_l, K*Cin_l)      bf16 BN-folded weight
      refs[2 + 2*l]           b_ref_l (Cout_l, 1)            f32 BN-folded bias
      refs[1 + 2*n_layers]    o_ref   (1, Cmel, Tp)          f32 output
      refs[2 + 2*n_layers]    act_ref (C_MAX, 2*HALO + Tp)   bf16 activation scratch
    """
    x_ref = refs[0]
    o_ref = refs[1 + 2 * n_layers]
    act_ref = refs[2 + 2 * n_layers]

    t = o_ref.shape[2]           # lane-padded time extent (multiple of 128)
    ksize = 2 * pad + 1
    c_rows = act_ref.shape[0]

    # Zero only the halo columns the shifted taps actually read.  Done every
    # grid step (NOT gated on program_id) so each megacore's scratch is valid.
    zeros_halo = jnp.zeros((c_rows, pad), act_ref.dtype)
    act_ref[:, HALO - pad:HALO] = zeros_halo
    act_ref[:, HALO + t:HALO + t + pad] = zeros_halo

    # Stage the input (wrapper already zero-padded the [t_real, t) columns).
    cin0 = x_ref.shape[1]
    act_ref[0:cin0, HALO:HALO + t] = x_ref[0].astype(act_ref.dtype)

    y = None
    for layer in range(n_layers):
        w_ref = refs[1 + 2 * layer]
        b_ref = refs[2 + 2 * layer]
        cout, kcin = w_ref.shape
        cin = kcin // ksize

        # One MXU matmul per layer: stack the K shifted slices along the
        # contraction axis and contract over K*Cin in a single dot.
        x_stack = jnp.concatenate(
            [act_ref[0:cin, HALO - pad + k: HALO - pad + k + t]
             for k in range(ksize)],
            axis=0)                                            # (K*Cin, T) bf16
        acc = jnp.dot(w_ref[...], x_stack,
                      preferred_element_type=jnp.float32)      # (Cout, T) f32

        y = acc + b_ref[...]                                   # bias (Cout, 1)
        if layer < n_layers - 1:
            y = jnp.tanh(y)
            if t_real < t:
                # Keep 'same'-padding semantics: padded-T columns must stay 0
                # so they act as zero padding for the next layer.
                lane_idx = jax.lax.broadcasted_iota(jnp.int32, y.shape, 1)
                y = jnp.where(lane_idx < t_real, y, 0.0)
            act_ref[0:cout, HALO:HALO + t] = y.astype(act_ref.dtype)
        # F.dropout(..., training=False) is the identity in eval mode.

    o_ref[0] = y.astype(o_ref.dtype)


def postnet_forward(x_nct, params):
    """x_nct: (B, n_mel_channels, T) exactly like the PyTorch module; same layout out."""
    B, c_mel, T = x_nct.shape
    n_layers = len(params)

    # Lane-dense T: pad to a multiple of 128 and slice back after the call.
    t_pad = ((T + LANE - 1) // LANE) * LANE
    if t_pad != T:
        x_nct = jnp.pad(x_nct, ((0, 0), (0, 0), (0, t_pad - T)))

    args = [x_nct]
    in_specs = [pl.BlockSpec((1, c_mel, t_pad), lambda b: (b, 0, 0))]
    flops = 0
    for p in params:
        cout, kcin = p["w"].shape
        args.append(p["w"])
        in_specs.append(pl.BlockSpec((cout, kcin), lambda b: (0, 0)))
        args.append(p["bias"])
        in_specs.append(pl.BlockSpec((cout, 1), lambda b: (0, 0)))
        flops += 2 * B * t_pad * cout * kcin
    transcendentals = B * t_pad * sum(p["bias"].shape[0] for p in params[:-1])
    bytes_accessed = (x_nct.size * 4 + B * c_mel * t_pad * 4
                      + B * sum(p["w"].size * 2 + p["bias"].size * 4 for p in params))

    kern = functools.partial(postnet_fused_kernel,
                             n_layers=n_layers, pad=PAD, t_real=T)
    out = pl.pallas_call(
        kern,
        out_shape=jax.ShapeDtypeStruct((B, c_mel, t_pad), jnp.float32),
        grid_spec=pltpu.PrefetchScalarGridSpec(
            num_scalar_prefetch=0,
            grid=(B,),
            in_specs=in_specs,
            out_specs=pl.BlockSpec((1, c_mel, t_pad), lambda b: (b, 0, 0)),
            scratch_shapes=[pltpu.VMEM((C_MAX, 2 * HALO + t_pad), jnp.bfloat16)],
        ),
        compiler_params=pltpu.CompilerParams(
            dimension_semantics=("parallel",)),
        cost_estimate=pl.CostEstimate(flops=flops,
                                      transcendentals=transcendentals,
                                      bytes_accessed=bytes_accessed),
    )(*args)
    return out[:, :, :T]


def init_postnet_params(key):
    """Deterministic parameter init mirroring the module's __init__ shapes.

    Conv weights are generated in the PyTorch (Cout, Cin, K) layout, then the
    eval-mode BatchNorm is folded in:
        scale = gamma / sqrt(var + eps)
        W_folded[o, k*Cin + i] = W[o, i, k] * scale[o]      (Cout, K*Cin) bf16
        bias_folded[o]         = (b_conv[o] - mean[o]) * scale[o] + beta[o]
    """
    layer_dims = [(N_MEL_CHANNELS, POSTNET_EMBEDDING_DIM)]
    layer_dims += [(POSTNET_EMBEDDING_DIM, POSTNET_EMBEDDING_DIM)] * (POSTNET_N_CONVOLUTIONS - 2)
    layer_dims += [(POSTNET_EMBEDDING_DIM, N_MEL_CHANNELS)]
    gains = [5.0 / 3.0] * (POSTNET_N_CONVOLUTIONS - 1) + [1.0]   # tanh gains, linear gain

    params = []
    for (cin, cout), gain in zip(layer_dims, gains):
        key, k_w, k_b, k_g, k_be, k_m, k_v = jax.random.split(key, 7)
        fan_in, fan_out = cin * POSTNET_KERNEL_SIZE, cout * POSTNET_KERNEL_SIZE
        bound = gain * jnp.sqrt(6.0 / (fan_in + fan_out))        # xavier_uniform
        w_oiw = jax.random.uniform(k_w, (cout, cin, POSTNET_KERNEL_SIZE),
                                   jnp.float32, -bound, bound)
        b_conv = jax.random.uniform(k_b, (cout,), jnp.float32, -0.1, 0.1)
        gamma = 1.0 + 0.1 * jax.random.normal(k_g, (cout,), jnp.float32)
        beta = 0.1 * jax.random.normal(k_be, (cout,), jnp.float32)
        run_mean = 0.1 * jax.random.normal(k_m, (cout,), jnp.float32)
        run_var = 1.0 + 0.5 * jax.random.uniform(k_v, (cout,), jnp.float32)

        scale = gamma / jnp.sqrt(run_var + BN_EPS)                       # (Cout,)
        w_scaled = w_oiw * scale[:, None, None]                          # (Cout, Cin, K)
        w_folded = jnp.transpose(w_scaled, (0, 2, 1)).reshape(
            cout, POSTNET_KERNEL_SIZE * cin).astype(jnp.bfloat16)        # (Cout, K*Cin)
        bias = ((b_conv - run_mean) * scale + beta).reshape(cout, 1)     # f32
        params.append(dict(w=w_folded, bias=bias))
    return params


def postnet_reference(x_nct, params):
    """Pure-JAX reference (lax.conv) using the same bf16 folded weights and the
    same bf16 inter-layer precision as the kernel; (B, C, T) layout."""
    x = x_nct.astype(jnp.bfloat16)
    k = POSTNET_KERNEL_SIZE
    for i, p in enumerate(params):
        cout, kcin = p["w"].shape
        cin = kcin // k
        w_oiw = p["w"].reshape(cout, k, cin).transpose(0, 2, 1)   # (Cout, Cin, K) bf16
        y = jax.lax.conv_general_dilated(
            x, w_oiw, window_strides=(1,), padding=[(PAD, PAD)],
            dimension_numbers=("NCW", "OIW", "NCW"),
            preferred_element_type=jnp.float32)
        y = y + p["bias"][None]                                   # (1, Cout, 1) broadcast
        if i < len(params) - 1:
            y = jnp.tanh(y)
            x = y.astype(jnp.bfloat16)
        else:
            x = y
    return x


if __name__ == "__main__":
    key = jax.random.PRNGKey(0)
    k_params, k_x = jax.random.split(key)

    B, T = 2, 24
    params = init_postnet_params(k_params)
    x = jax.random.normal(k_x, (B, N_MEL_CHANNELS, T), jnp.float32)

    out = postnet_forward(x, params)
    out = jax.block_until_ready(out)

    ref = postnet_reference(x, params)
    assert out.shape == (B, N_MEL_CHANNELS, T)
    assert jnp.allclose(out, ref, atol=1e-2, rtol=1e-2), "mismatch vs reference"

    print("KERNEL_OK")
</pallas_src>

<mosaic_0001>
module attributes {stable_mosaic.version = 11 : i64} {
  func.func @postnet_fused_kernel(%arg0: i32, %arg1: memref<1x16x128xf32, #tpu.memory_space<vmem>>, %arg2: memref<32x80xbf16, #tpu.memory_space<vmem>>, %arg3: memref<32x1xf32, #tpu.memory_space<vmem>>, %arg4: memref<32x160xbf16, #tpu.memory_space<vmem>>, %arg5: memref<32x1xf32, #tpu.memory_space<vmem>>, %arg6: memref<32x160xbf16, #tpu.memory_space<vmem>>, %arg7: memref<32x1xf32, #tpu.memory_space<vmem>>, %arg8: memref<32x160xbf16, #tpu.memory_space<vmem>>, %arg9: memref<32x1xf32, #tpu.memory_space<vmem>>, %arg10: memref<16x160xbf16, #tpu.memory_space<vmem>>, %arg11: memref<16x1xf32, #tpu.memory_space<vmem>>, %arg12: memref<1x16x128xf32, #tpu.memory_space<vmem>>, %arg13: memref<32x384xbf16, #tpu.memory_space<vmem>>) attributes {dimension_semantics = [#tpu.dimension_semantics<parallel>], iteration_bounds = array<i64: 2>, scalar_prefetch = 0 : i64, scratch_operands = 1 : i64, tpu.core_type = #tpu.core_type<tc>, window_params = [{transform_indices = @transform_0, window_bounds = array<i64: 1, 16, 128>}, {pipeline_mode = #tpu.pipeline_mode<synchronous>, transform_indices = @transform_1, window_bounds = array<i64: 32, 80>}, {pipeline_mode = #tpu.pipeline_mode<synchronous>, transform_indices = @transform_2, window_bounds = array<i64: 32, 1>}, {pipeline_mode = #tpu.pipeline_mode<synchronous>, transform_indices = @transform_3, window_bounds = array<i64: 32, 160>}, {pipeline_mode = #tpu.pipeline_mode<synchronous>, transform_indices = @transform_4, window_bounds = array<i64: 32, 1>}, {pipeline_mode = #tpu.pipeline_mode<synchronous>, transform_indices = @transform_5, window_bounds = array<i64: 32, 160>}, {pipeline_mode = #tpu.pipeline_mode<synchronous>, transform_indices = @transform_6, window_bounds = array<i64: 32, 1>}, {pipeline_mode = #tpu.pipeline_mode<synchronous>, transform_indices = @transform_7, window_bounds = array<i64: 32, 160>}, {pipeline_mode = #tpu.pipeline_mode<synchronous>, transform_indices = @transform_8, window_bounds = array<i64: 32, 1>}, {pipeline_mode = #tpu.pipeline_mode<synchronous>, transform_indices = @transform_9, window_bounds = array<i64: 16, 160>}, {pipeline_mode = #tpu.pipeline_mode<synchronous>, transform_indices = @transform_10, window_bounds = array<i64: 16, 1>}, {transform_indices = @transform_11, window_bounds = array<i64: 1, 16, 128>}]} {
    %cst = arith.constant 0.000000e+00 : bf16
    %0 = vector.broadcast %cst : bf16 to vector<32x2xbf16>
    %c0 = arith.constant 0 : index
    %c126 = arith.constant 126 : index
    %1 = vector.load %arg13[%c0, %c126] : memref<32x384xbf16, #tpu.memory_space<vmem>>, vector<32x2xbf16>
    tpu.vector_store %arg13[%c0, %c126], %0 {strides = array<i32>} : memref<32x384xbf16, #tpu.memory_space<vmem>>, vector<32x2xbf16>,
    %c0_0 = arith.constant 0 : index
    %c256 = arith.constant 256 : index
    %2 = vector.load %arg13[%c0_0, %c256] : memref<32x384xbf16, #tpu.memory_space<vmem>>, vector<32x2xbf16>
    tpu.vector_store %arg13[%c0_0, %c256], %0 {strides = array<i32>} : memref<32x384xbf16, #tpu.memory_space<vmem>>, vector<32x2xbf16>,
    %c0_1 = arith.constant 0 : index
    %c0_2 = arith.constant 0 : index
    %c0_3 = arith.constant 0 : index
    %3 = vector.load %arg1[%c0_1, %c0_2, %c0_3] : memref<1x16x128xf32, #tpu.memory_space<vmem>>, vector<1x16x128xf32>
    %4 = vector.shape_cast %3 : vector<1x16x128xf32> to vector<16x128xf32>
    %5 = arith.truncf %4 : vector<16x128xf32> to vector<16x128xbf16>
    %c0_4 = arith.constant 0 : index
    %c128 = arith.constant 128 : index
    %6 = vector.load %arg13[%c0_4, %c128] : memref<32x384xbf16, #tpu.memory_space<vmem>>, vector<16x128xbf16>
    tpu.vector_store %arg13[%c0_4, %c128], %5 {strides = array<i32>} : memref<32x384xbf16, #tpu.memory_space<vmem>>, vector<16x128xbf16>,
    %c0_5 = arith.constant 0 : index
    %c126_6 = arith.constant 126 : index
    %7 = vector.load %arg13[%c0_5, %c126_6] : memref<32x384xbf16, #tpu.memory_space<vmem>>, vector<16x128xbf16>
    %c0_7 = arith.constant 0 : index
    %c127 = arith.constant 127 : index
    %8 = vector.load %arg13[%c0_7, %c127] : memref<32x384xbf16, #tpu.memory_space<vmem>>, vector<16x128xbf16>
    %c0_8 = arith.constant 0 : index
    %c128_9 = arith.constant 128 : index
    %9 = vector.load %arg13[%c0_8, %c128_9] : memref<32x384xbf16, #tpu.memory_space<vmem>>, vector<16x128xbf16>
    %c0_10 = arith.constant 0 : index
    %c129 = arith.constant 129 : index
    %10 = vector.load %arg13[%c0_10, %c129] : memref<32x384xbf16, #tpu.memory_space<vmem>>, vector<16x128xbf16>
    %c0_11 = arith.constant 0 : index
    %c130 = arith.constant 130 : index
    %11 = vector.load %arg13[%c0_11, %c130] : memref<32x384xbf16, #tpu.memory_space<vmem>>, vector<16x128xbf16>
    %12 = tpu.concatenate %7, %8, %9, %10, %11 in 0 : vector<16x128xbf16>, vector<16x128xbf16>, vector<16x128xbf16>, vector<16x128xbf16>, vector<16x128xbf16> -> vector<80x128xbf16>
    %c0_12 = arith.constant 0 : index
    %c0_13 = arith.constant 0 : index
    %13 = vector.load %arg2[%c0_12, %c0_13] : memref<32x80xbf16, #tpu.memory_space<vmem>>, vector<32x80xbf16>
    %cst_14 = arith.constant dense<0.000000e+00> : vector<32x128xf32>
    %14 = tpu.matmul %13, %12, %cst_14 {dimension_numbers = #tpu.dot_dimension_numbers<[1], [0], [0], [1], [0, 0, 1, 1], [], []>} : vector<32x80xbf16>, vector<80x128xbf16>, vector<32x128xf32> -> vector<32x128xf32>
    %c0_15 = arith.constant 0 : index
    %c0_16 = arith.constant 0 : index
    %15 = vector.load %arg3[%c0_15, %c0_16] : memref<32x1xf32, #tpu.memory_space<vmem>>, vector<32x1xf32>
    %16 = vector.broadcast %15 : vector<32x1xf32> to vector<32x128xf32>
    %17 = arith.addf %14, %16 : vector<32x128xf32>
    %18 = math.tanh %17 : vector<32x128xf32>
    %19 = tpu.iota {dimensions = array<i32: 1>} : vector<32x128xi32>
    %c24_i32 = arith.constant 24 : i32
    %20 = vector.broadcast %c24_i32 : i32 to vector<32x128xi32>
    %21 = arith.cmpi slt, %19, %20 : vector<32x128xi32>
    %cst_17 = arith.constant 0.000000e+00 : f32
    %22 = vector.broadcast %cst_17 : f32 to vector<32x128xf32>
    %23 = arith.select %21, %18, %22 : vector<32x128xi1>, vector<32x128xf32>
    %24 = arith.truncf %23 : vector<32x128xf32> to vector<32x128xbf16>
    %c0_18 = arith.constant 0 : index
    %c128_19 = arith.constant 128 : index
    %25 = vector.load %arg13[%c0_18, %c128_19] : memref<32x384xbf16, #tpu.memory_space<vmem>>, vector<32x128xbf16>
    tpu.vector_store %arg13[%c0_18, %c128_19], %24 {strides = array<i32>} : memref<32x384xbf16, #tpu.memory_space<vmem>>, vector<32x128xbf16>,
    %c0_20 = arith.constant 0 : index
    %c126_21 = arith.constant 126 : index
    %26 = vector.load %arg13[%c0_20, %c126_21] : memref<32x384xbf16, #tpu.memory_space<vmem>>, vector<32x128xbf16>
    %c0_22 = arith.constant 0 : index
    %c127_23 = arith.constant 127 : index
    %27 = vector.load %arg13[%c0_22, %c127_23] : memref<32x384xbf16, #tpu.memory_space<vmem>>, vector<32x128xbf16>
    %c0_24 = arith.constant 0 : index
    %c128_25 = arith.constant 128 : index
    %28 = vector.load %arg13[%c0_24, %c128_25] : memref<32x384xbf16, #tpu.memory_space<vmem>>, vector<32x128xbf16>
    %c0_26 = arith.constant 0 : index
    %c129_27 = arith.constant 129 : index
    %29 = vector.load %arg13[%c0_26, %c129_27] : memref<32x384xbf16, #tpu.memory_space<vmem>>, vector<32x128xbf16>
    %c0_28 = arith.constant 0 : index
    %c130_29 = arith.constant 130 : index
    %30 = vector.load %arg13[%c0_28, %c130_29] : memref<32x384xbf16, #tpu.memory_space<vmem>>, vector<32x128xbf16>
    %31 = tpu.concatenate %26, %27, %28, %29, %30 in 0 : vector<32x128xbf16>, vector<32x128xbf16>, vector<32x128xbf16>, vector<32x128xbf16>, vector<32x128xbf16> -> vector<160x128xbf16>
    %c0_30 = arith.constant 0 : index
    %c0_31 = arith.constant 0 : index
    %32 = vector.load %arg4[%c0_30, %c0_31] : memref<32x160xbf16, #tpu.memory_space<vmem>>, vector<32x160xbf16>
    %cst_32 = arith.constant dense<0.000000e+00> : vector<32x128xf32>
    %33 = tpu.matmul %32, %31, %cst_32 {dimension_numbers = #tpu.dot_dimension_numbers<[1], [0], [0], [1], [0, 0, 1, 1], [], []>} : vector<32x160xbf16>, vector<160x128xbf16>, vector<32x128xf32> -> vector<32x128xf32>
    %c0_33 = arith.constant 0 : index
    %c0_34 = arith.constant 0 : index
    %34 = vector.load %arg5[%c0_33, %c0_34] : memref<32x1xf32, #tpu.memory_space<vmem>>, vector<32x1xf32>
    %35 = vector.broadcast %34 : vector<32x1xf32> to vector<32x128xf32>
    %36 = arith.addf %33, %35 : vector<32x128xf32>
    %37 = math.tanh %36 : vector<32x128xf32>
    %38 = tpu.iota {dimensions = array<i32: 1>} : vector<32x128xi32>
    %c24_i32_35 = arith.constant 24 : i32
    %39 = vector.broadcast %c24_i32_35 : i32 to vector<32x128xi32>
    %40 = arith.cmpi slt, %38, %39 : vector<32x128xi32>
    %cst_36 = arith.constant 0.000000e+00 : f32
    %41 = vector.broadcast %cst_36 : f32 to vector<32x128xf32>
    %42 = arith.select %40, %37, %41 : vector<32x128xi1>, vector<32x128xf32>
    %43 = arith.truncf %42 : vector<32x128xf32> to vector<32x128xbf16>
    %c0_37 = arith.constant 0 : index
    %c128_38 = arith.constant 128 : index
    %44 = vector.load %arg13[%c0_37, %c128_38] : memref<32x384xbf16, #tpu.memory_space<vmem>>, vector<32x128xbf16>
    tpu.vector_store %arg13[%c0_37, %c128_38], %43 {strides = array<i32>} : memref<32x384xbf16, #tpu.memory_space<vmem>>, vector<32x128xbf16>,
    %c0_39 = arith.constant 0 : index
    %c126_40 = arith.constant 126 : index
    %45 = vector.load %arg13[%c0_39, %c126_40] : memref<32x384xbf16, #tpu.memory_space<vmem>>, vector<32x128xbf16>
    %c0_41 = arith.constant 0 : index
    %c127_42 = arith.constant 127 : index
    %46 = vector.load %arg13[%c0_41, %c127_42] : memref<32x384xbf16, #tpu.memory_space<vmem>>, vector<32x128xbf16>
    %c0_43 = arith.constant 0 : index
    %c128_44 = arith.constant 128 : index
    %47 = vector.load %arg13[%c0_43, %c128_44] : memref<32x384xbf16, #tpu.memory_space<vmem>>, vector<32x128xbf16>
    %c0_45 = arith.constant 0 : index
    %c129_46 = arith.constant 129 : index
    %48 = vector.load %arg13[%c0_45, %c129_46] : memref<32x384xbf16, #tpu.memory_space<vmem>>, vector<32x128xbf16>
    %c0_47 = arith.constant 0 : index
    %c130_48 = arith.constant 130 : index
    %49 = vector.load %arg13[%c0_47, %c130_48] : memref<32x384xbf16, #tpu.memory_space<vmem>>, vector<32x128xbf16>
    %50 = tpu.concatenate %45, %46, %47, %48, %49 in 0 : vector<32x128xbf16>, vector<32x128xbf16>, vector<32x128xbf16>, vector<32x128xbf16>, vector<32x128xbf16> -> vector<160x128xbf16>
    %c0_49 = arith.constant 0 : index
    %c0_50 = arith.constant 0 : index
    %51 = vector.load %arg6[%c0_49, %c0_50] : memref<32x160xbf16, #tpu.memory_space<vmem>>, vector<32x160xbf16>
    %cst_51 = arith.constant dense<0.000000e+00> : vector<32x128xf32>
    %52 = tpu.matmul %51, %50, %cst_51 {dimension_numbers = #tpu.dot_dimension_numbers<[1], [0], [0], [1], [0, 0, 1, 1], [], []>} : vector<32x160xbf16>, vector<160x128xbf16>, vector<32x128xf32> -> vector<32x128xf32>
    %c0_52 = arith.constant 0 : index
    %c0_53 = arith.constant 0 : index
    %53 = vector.load %arg7[%c0_52, %c0_53] : memref<32x1xf32, #tpu.memory_space<vmem>>, vector<32x1xf32>
    %54 = vector.broadcast %53 : vector<32x1xf32> to vector<32x128xf32>
    %55 = arith.addf %52, %54 : vector<32x128xf32>
    %56 = math.tanh %55 : vector<32x128xf32>
    %57 = tpu.iota {dimensions = array<i32: 1>} : vector<32x128xi32>
    %c24_i32_54 = arith.constant 24 : i32
    %58 = vector.broadcast %c24_i32_54 : i32 to vector<32x128xi32>
    %59 = arith.cmpi slt, %57, %58 : vector<32x128xi32>
    %cst_55 = arith.constant 0.000000e+00 : f32
    %60 = vector.broadcast %cst_55 : f32 to vector<32x128xf32>
    %61 = arith.select %59, %56, %60 : vector<32x128xi1>, vector<32x128xf32>
    %62 = arith.truncf %61 : vector<32x128xf32> to vector<32x128xbf16>
    %c0_56 = arith.constant 0 : index
    %c128_57 = arith.constant 128 : index
    %63 = vector.load %arg13[%c0_56, %c128_57] : memref<32x384xbf16, #tpu.memory_space<vmem>>, vector<32x128xbf16>
    tpu.vector_store %arg13[%c0_56, %c128_57], %62 {strides = array<i32>} : memref<32x384xbf16, #tpu.memory_space<vmem>>, vector<32x128xbf16>,
    %c0_58 = arith.constant 0 : index
    %c126_59 = arith.constant 126 : index
    %64 = vector.load %arg13[%c0_58, %c126_59] : memref<32x384xbf16, #tpu.memory_space<vmem>>, vector<32x128xbf16>
    %c0_60 = arith.constant 0 : index
    %c127_61 = arith.constant 127 : index
    %65 = vector.load %arg13[%c0_60, %c127_61] : memref<32x384xbf16, #tpu.memory_space<vmem>>, vector<32x128xbf16>
    %c0_62 = arith.constant 0 : index
    %c128_63 = arith.constant 128 : index
    %66 = vector.load %arg13[%c0_62, %c128_63] : memref<32x384xbf16, #tpu.memory_space<vmem>>, vector<32x128xbf16>
    %c0_64 = arith.constant 0 : index
    %c129_65 = arith.constant 129 : index
    %67 = vector.load %arg13[%c0_64, %c129_65] : memref<32x384xbf16, #tpu.memory_space<vmem>>, vector<32x128xbf16>
    %c0_66 = arith.constant 0 : index
    %c130_67 = arith.constant 130 : index
    %68 = vector.load %arg13[%c0_66, %c130_67] : memref<32x384xbf16, #tpu.memory_space<vmem>>, vector<32x128xbf16>
    %69 = tpu.concatenate %64, %65, %66, %67, %68 in 0 : vector<32x128xbf16>, vector<32x128xbf16>, vector<32x128xbf16>, vector<32x128xbf16>, vector<32x128xbf16> -> vector<160x128xbf16>
    %c0_68 = arith.constant 0 : index
    %c0_69 = arith.constant 0 : index
    %70 = vector.load %arg8[%c0_68, %c0_69] : memref<32x160xbf16, #tpu.memory_space<vmem>>, vector<32x160xbf16>
    %cst_70 = arith.constant dense<0.000000e+00> : vector<32x128xf32>
    %71 = tpu.matmul %70, %69, %cst_70 {dimension_numbers = #tpu.dot_dimension_numbers<[1], [0], [0], [1], [0, 0, 1, 1], [], []>} : vector<32x160xbf16>, vector<160x128xbf16>, vector<32x128xf32> -> vector<32x128xf32>
    %c0_71 = arith.constant 0 : index
    %c0_72 = arith.constant 0 : index
    %72 = vector.load %arg9[%c0_71, %c0_72] : memref<32x1xf32, #tpu.memory_space<vmem>>, vector<32x1xf32>
    %73 = vector.broadcast %72 : vector<32x1xf32> to vector<32x128xf32>
    %74 = arith.addf %71, %73 : vector<32x128xf32>
    %75 = math.tanh %74 : vector<32x128xf32>
    %76 = tpu.iota {dimensions = array<i32: 1>} : vector<32x128xi32>
    %c24_i32_73 = arith.constant 24 : i32
    %77 = vector.broadcast %c24_i32_73 : i32 to vector<32x128xi32>
    %78 = arith.cmpi slt, %76, %77 : vector<32x128xi32>
    %cst_74 = arith.constant 0.000000e+00 : f32
    %79 = vector.broadcast %cst_74 : f32 to vector<32x128xf32>
    %80 = arith.select %78, %75, %79 : vector<32x128xi1>, vector<32x128xf32>
    %81 = arith.truncf %80 : vector<32x128xf32> to vector<32x128xbf16>
    %c0_75 = arith.constant 0 : index
    %c128_76 = arith.constant 128 : index
    %82 = vector.load %arg13[%c0_75, %c128_76] : memref<32x384xbf16, #tpu.memory_space<vmem>>, vector<32x128xbf16>
    tpu.vector_store %arg13[%c0_75, %c128_76], %81 {strides = array<i32>} : memref<32x384xbf16, #tpu.memory_space<vmem>>, vector<32x128xbf16>,
    %c0_77 = arith.constant 0 : index
    %c126_78 = arith.constant 126 : index
    %83 = vector.load %arg13[%c0_77, %c126_78] : memref<32x384xbf16, #tpu.memory_space<vmem>>, vector<32x128xbf16>
    %c0_79 = arith.constant 0 : index
    %c127_80 = arith.constant 127 : index
    %84 = vector.load %arg13[%c0_79, %c127_80] : memref<32x384xbf16, #tpu.memory_space<vmem>>, vector<32x128xbf16>
    %c0_81 = arith.constant 0 : index
    %c128_82 = arith.constant 128 : index
    %85 = vector.load %arg13[%c0_81, %c128_82] : memref<32x384xbf16, #tpu.memory_space<vmem>>, vector<32x128xbf16>
    %c0_83 = arith.constant 0 : index
    %c129_84 = arith.constant 129 : index
    %86 = vector.load %arg13[%c0_83, %c129_84] : memref<32x384xbf16, #tpu.memory_space<vmem>>, vector<32x128xbf16>
    %c0_85 = arith.constant 0 : index
    %c130_86 = arith.constant 130 : index
    %87 = vector.load %arg13[%c0_85, %c130_86] : memref<32x384xbf16, #tpu.memory_space<vmem>>, vector<32x128xbf16>
    %88 = tpu.concatenate %83, %84, %85, %86, %87 in 0 : vector<32x128xbf16>, vector<32x128xbf16>, vector<32x128xbf16>, vector<32x128xbf16>, vector<32x128xbf16> -> vector<160x128xbf16>
    %c0_87 = arith.constant 0 : index
    %c0_88 = arith.constant 0 : index
    %89 = vector.load %arg10[%c0_87, %c0_88] : memref<16x160xbf16, #tpu.memory_space<vmem>>, vector<16x160xbf16>
    %cst_89 = arith.constant dense<0.000000e+00> : vector<16x128xf32>
    %90 = tpu.matmul %89, %88, %cst_89 {dimension_numbers = #tpu.dot_dimension_numbers<[1], [0], [0], [1], [0, 0, 1, 1], [], []>} : vector<16x160xbf16>, vector<160x128xbf16>, vector<16x128xf32> -> vector<16x128xf32>
    %c0_90 = arith.constant 0 : index
    %c0_91 = arith.constant 0 : index
    %91 = vector.load %arg11[%c0_90, %c0_91] : memref<16x1xf32, #tpu.memory_space<vmem>>, vector<16x1xf32>
    %92 = vector.broadcast %91 : vector<16x1xf32> to vector<16x128xf32>
    %93 = arith.addf %90, %92 : vector<16x128xf32>
    %c0_92 = arith.constant 0 : index
    %c0_93 = arith.constant 0 : index
    %c0_94 = arith.constant 0 : index
    %94 = vector.load %arg12[%c0_92, %c0_93, %c0_94] : memref<1x16x128xf32, #tpu.memory_space<vmem>>, vector<1x16x128xf32>
    %95 = vector.shape_cast %94 : vector<1x16x128xf32> to vector<16x128xf32>
    %96 = vector.shape_cast %93 : vector<16x128xf32> to vector<1x16x128xf32>
    tpu.vector_store %arg12[%c0_92, %c0_93, %c0_94], %96 {strides = array<i32>} : memref<1x16x128xf32, #tpu.memory_space<vmem>>, vector<1x16x128xf32>,
    return
  }
  func.func @transform_0(%arg0: i32) -> (i32, i32, i32) {
    %c0_i32 = arith.constant 0 : i32
    %c0_i32_0 = arith.constant 0 : i32
    %c0_i32_1 = arith.constant 0 : i32
    return %arg0, %c0_i32, %c0_i32_0 : i32, i32, i32
  }
  func.func @transform_1(%arg0: i32) -> (i32, i32) {
    %c0_i32 = arith.constant 0 : i32
    %c0_i32_0 = arith.constant 0 : i32
    %c0_i32_1 = arith.constant 0 : i32
    return %c0_i32, %c0_i32_0 : i32, i32
  }
  func.func @transform_2(%arg0: i32) -> (i32, i32) {
    %c0_i32 = arith.constant 0 : i32
    %c0_i32_0 = arith.constant 0 : i32
    %c0_i32_1 = arith.constant 0 : i32
    return %c0_i32, %c0_i32_0 : i32, i32
  }
  func.func @transform_3(%arg0: i32) -> (i32, i32) {
    %c0_i32 = arith.constant 0 : i32
    %c0_i32_0 = arith.constant 0 : i32
    %c0_i32_1 = arith.constant 0 : i32
    return %c0_i32, %c0_i32_0 : i32, i32
  }
  func.func @transform_4(%arg0: i32) -> (i32, i32) {
    %c0_i32 = arith.constant 0 : i32
    %c0_i32_0 = arith.constant 0 : i32
    %c0_i32_1 = arith.constant 0 : i32
    return %c0_i32, %c0_i32_0 : i32, i32
  }
  func.func @transform_5(%arg0: i32) -> (i32, i32) {
    %c0_i32 = arith.constant 0 : i32
    %c0_i32_0 = arith.constant 0 : i32
    %c0_i32_1 = arith.constant 0 : i32
    return %c0_i32, %c0_i32_0 : i32, i32
  }
  func.func @transform_6(%arg0: i32) -> (i32, i32) {
    %c0_i32 = arith.constant 0 : i32
    %c0_i32_0 = arith.constant 0 : i32
    %c0_i32_1 = arith.constant 0 : i32
    return %c0_i32, %c0_i32_0 : i32, i32
  }
  func.func @transform_7(%arg0: i32) -> (i32, i32) {
    %c0_i32 = arith.constant 0 : i32
    %c0_i32_0 = arith.constant 0 : i32
    %c0_i32_1 = arith.constant 0 : i32
    return %c0_i32, %c0_i32_0 : i32, i32
  }
  func.func @transform_8(%arg0: i32) -> (i32, i32) {
    %c0_i32 = arith.constant 0 : i32
    %c0_i32_0 = arith.constant 0 : i32
    %c0_i32_1 = arith.constant 0 : i32
    return %c0_i32, %c0_i32_0 : i32, i32
  }
  func.func @transform_9(%arg0: i32) -> (i32, i32) {
    %c0_i32 = arith.constant 0 : i32
    %c0_i32_0 = arith.constant 0 : i32
    %c0_i32_1 = arith.constant 0 : i32
    return %c0_i32, %c0_i32_0 : i32, i32
  }
  func.func @transform_10(%arg0: i32) -> (i32, i32) {
    %c0_i32 = arith.constant 0 : i32
    %c0_i32_0 = arith.constant 0 : i32
    %c0_i32_1 = arith.constant 0 : i32
    return %c0_i32, %c0_i32_0 : i32, i32
  }
  func.func @transform_11(%arg0: i32) -> (i32, i32, i32) {
    %c0_i32 = arith.constant 0 : i32
    %c0_i32_0 = arith.constant 0 : i32
    %c0_i32_1 = arith.constant 0 : i32
    return %arg0, %c0_i32, %c0_i32_0 : i32, i32, i32
  }
}

</mosaic_0001>

<llo_original>
// kernel: tpu_custom_call.1
$region0: #{tpu_custom_call.1}
  #allocation0 [shape = 'u32[]', space=smem, size = 0x4, offset = 0x4, fixed_abs, tag = 'smem constant byte address 0x4 - core index']
  #allocation1 [shape = 'u32[144,128]{1,0:T(1,128)}', space=vmem, size = 0x12000, scoped, tag = 'internal scratch']
  #allocation2 [shape = 'bf16[32,384]{1,0:T(8,128)(2,1)}', space=vmem, size = 0x6000, scoped, tag = 'scratch operand']
  %s0 = inlined_call_operand.vmem [shape: f32[2,16,128], index: 0, kind: input, shape index: {}]
  %s1 = inlined_call_operand.vmem [shape: bf16[32,80], index: 1, kind: input, shape index: {}]
  %s2 = inlined_call_operand.vmem [shape: f32[32,1], index: 2, kind: input, shape index: {}]
  %s3 = inlined_call_operand.vmem [shape: bf16[32,160], index: 3, kind: input, shape index: {}]
  %s4 = inlined_call_operand.vmem [shape: f32[32,1], index: 4, kind: input, shape index: {}]
  %s5 = inlined_call_operand.vmem [shape: bf16[32,160], index: 5, kind: input, shape index: {}]
  %s6 = inlined_call_operand.vmem [shape: f32[32,1], index: 6, kind: input, shape index: {}]
  %s7 = inlined_call_operand.vmem [shape: bf16[32,160], index: 7, kind: input, shape index: {}]
  %s8 = inlined_call_operand.vmem [shape: f32[32,1], index: 8, kind: input, shape index: {}]
  %s9 = inlined_call_operand.vmem [shape: bf16[16,160], index: 9, kind: input, shape index: {}]
  %s10 = inlined_call_operand.vmem [shape: f32[16,1], index: 10, kind: input, shape index: {}]
  %s11 = inlined_call_operand.hbm [shape: f32[2,16,128], index: 11, kind: output, shape index: {}]
  %s12 = sld [smem:[#allocation0]]
  $region77: #{tpu_custom_call.1} parent=0
    _
  %s14 = ssub.s32 1, %s12
  %s15 = scalar_select 0, %s14, %s12
  $region1: #{tpu_custom_call.1} parent=0
    #allocation3 [shape = 'u8[16384]{0}', space=vmem, size = 0x4000, scoped, tag = 'output window, operand 0']
    #allocation4 [shape = 's32[2]{0}', space=sflag, size = 0x8, scoped, tag = 'scoped memory for tpu_custom_call.1']
    %16 = vsyncpa [#allocation4], 0
    %s17 = scalar_lea.sflag [#allocation4], 1
    %18 = vsyncpa %s17, 0
    loop: start=0, step=1, limit=4
    $region2: #{tpu_custom_call.1} parent=1 // loop_pre_header
      _
    $region3: #{tpu_custom_call.1} parent=1 // loop_header
      %s20 = sphi 0, %s24
      %p21 = scmp.ge.s32.totalorder %s20, 4
      %s30 = sphi 0, %s32
      %s33 = sphi 0, %s30
      %s34 = sphi 0, %s33
      %s50 = sphi 0, %s34
      %s54 = sphi 0, %s54
      %s56 = sphi 0, %s54
      %s57 = sphi 0, %s56
      %s71 = sphi 0, %s57
      %s75 = sphi 0, %s75
      %s77 = sphi 0, %s75
      %s78 = sphi 0, %s77
      %s92 = sphi 0, %s78
      %s96 = sphi 0, %s96
      %s98 = sphi 0, %s96
      %s99 = sphi 0, %s98
      %s113 = sphi 0, %s99
      %s117 = sphi 0, %s117
      %s119 = sphi 0, %s117
      %s120 = sphi 0, %s119
      %s134 = sphi 0, %s120
      %s138 = sphi 0, %s138
      %s140 = sphi 0, %s138
      %s141 = sphi 0, %s140
      %s155 = sphi 0, %s141
      %s159 = sphi 0, %s159
      %s161 = sphi 0, %s159
      %s162 = sphi 0, %s161
      %s176 = sphi 0, %s162
      %s180 = sphi 0, %s180
      %s182 = sphi 0, %s180
      %s183 = sphi 0, %s182
      %s197 = sphi 0, %s183
      %s201 = sphi 0, %s201
      %s203 = sphi 0, %s201
      %s204 = sphi 0, %s203
      %s218 = sphi 0, %s204
      %s222 = sphi 0, %s222
      %s224 = sphi 0, %s222
      %s225 = sphi 0, %s224
      %s239 = sphi 0, %s225
      %s243 = sphi 0, %s243
      %s245 = sphi 0, %s243
      %s246 = sphi 0, %s245
      %s260 = sphi 0, %s246
      %s266 = sphi 0, %s268
      %s269 = sphi 0, %s266
      %s270 = sphi 0, %s269
      %s286 = sphi 0, %s270
    $region4: #{tpu_custom_call.1} parent=1 // loop_header_branch
      %23 = sbr.rel (%p21) target = $region8
    $region5: #{tpu_custom_call.1} parent=1 // loop_body
      %s25 = ssub.s32 %s20, 1
      %s26 = ssub.s32 %s20, 2
      %s27 = sadd.s32 %s20, 1
      %s28 = ssub.s32 %s20, %s27
      %p29 = scmp.eq.s32.totalorder %s28, 0
      %s31 = sadd.s32 %s30, 1
      %s32 = scalar_select %p29, %s30, %s31
      %p35 = pneg %p29
      %p36 = scmp.eq.s32.totalorder %s20, 1
      %p37 = por %p35, %p36
      %p38 = scmp.ne.s32.totalorder %s30, %s33
      %p39 = scmp.eq.s32.totalorder %s20, 0
      %p40 = por %p38, %p39
      %p41 = scmp.ne.s32.totalorder %s30, %s33
      %p42 = scmp.eq.s32.totalorder %s25, 1
      %p43 = por %p41, %p42
      %p44 = scmp.ne.s32.totalorder %s33, %s34
      %p45 = scmp.eq.s32.totalorder %s25, 0
      %p46 = por %p44, %p45
      %p47 = scmp.ne.s32.totalorder %s33, %s34
      %p48 = scmp.eq.s32.totalorder %s26, 1
      %p49 = por %p47, %p48
      %p51 = scmp.ne.s32.totalorder %s34, %s50
      %p52 = scmp.eq.s32.totalorder %s26, 0
      %p53 = por %p51, %p52
      %s55 = sadd.s32 %s54, 1
      %p58 = scmp.eq.s32.totalorder %s20, 1
      %p59 = scmp.ne.s32.totalorder %s54, %s56
      %p60 = scmp.eq.s32.totalorder %s20, 0
      %p61 = por %p59, %p60
      %p62 = scmp.ne.s32.totalorder %s54, %s56
      %p63 = scmp.eq.s32.totalorder %s25, 1
      %p64 = por %p62, %p63
      %p65 = scmp.ne.s32.totalorder %s56, %s57
      %p66 = scmp.eq.s32.totalorder %s25, 0
      %p67 = por %p65, %p66
      %p68 = scmp.ne.s32.totalorder %s56, %s57
      %p69 = scmp.eq.s32.totalorder %s26, 1
      %p70 = por %p68, %p69
      %p72 = scmp.ne.s32.totalorder %s57, %s71
      %p73 = scmp.eq.s32.totalorder %s26, 0
      %p74 = por %p72, %p73
      %s76 = sadd.s32 %s75, 1
      %p79 = scmp.eq.s32.totalorder %s20, 1
      %p80 = scmp.ne.s32.totalorder %s75, %s77
      %p81 = scmp.eq.s32.totalorder %s20, 0
      %p82 = por %p80, %p81
      %p83 = scmp.ne.s32.totalorder %s75, %s77
      %p84 = scmp.eq.s32.totalorder %s25, 1
      %p85 = por %p83, %p84
      %p86 = scmp.ne.s32.totalorder %s77, %s78
      %p87 = scmp.eq.s32.totalorder %s25, 0
      %p88 = por %p86, %p87
      %p89 = scmp.ne.s32.totalorder %s77, %s78
      %p90 = scmp.eq.s32.totalorder %s26, 1
      %p91 = por %p89, %p90
      %p93 = scmp.ne.s32.totalorder %s78, %s92
      %p94 = scmp.eq.s32.totalorder %s26, 0
      %p95 = por %p93, %p94
      %s97 = sadd.s32 %s96, 1
      %p100 = scmp.eq.s32.totalorder %s20, 1
      %p101 = scmp.ne.s32.totalorder %s96, %s98
      %p102 = scmp.eq.s32.totalorder %s20, 0
      %p103 = por %p101, %p102
      %p104 = scmp.ne.s32.totalorder %s96, %s98
      %p105 = scmp.eq.s32.totalorder %s25, 1
      %p106 = por %p104, %p105
      %p107 = scmp.ne.s32.totalorder %s98, %s99
      %p108 = scmp.eq.s32.totalorder %s25, 0
      %p109 = por %p107, %p108
      %p110 = scmp.ne.s32.totalorder %s98, %s99
      %p111 = scmp.eq.s32.totalorder %s26, 1
      %p112 = por %p110, %p111
      %p114 = scmp.ne.s32.totalorder %s99, %s113
      %p115 = scmp.eq.s32.totalorder %s26, 0
      %p116 = por %p114, %p115
      %s118 = sadd.s32 %s117, 1
      %p121 = scmp.eq.s32.totalorder %s20, 1
      %p122 = scmp.ne.s32.totalorder %s117, %s119
      %p123 = scmp.eq.s32.totalorder %s20, 0
      %p124 = por %p122, %p123
      %p125 = scmp.ne.s32.totalorder %s117, %s119
      %p126 = scmp.eq.s32.totalorder %s25, 1
      %p127 = por %p125, %p126
      %p128 = scmp.ne.s32.totalorder %s119, %s120
      %p129 = scmp.eq.s32.totalorder %s25, 0
      %p130 = por %p128, %p129
      %p131 = scmp.ne.s32.totalorder %s119, %s120
      %p132 = scmp.eq.s32.totalorder %s26, 1
      %p133 = por %p131, %p132
      %p135 = scmp.ne.s32.totalorder %s120, %s134
      %p136 = scmp.eq.s32.totalorder %s26, 0
      %p137 = por %p135, %p136
      %s139 = sadd.s32 %s138, 1
      %p142 = scmp.eq.s32.totalorder %s20, 1
      %p143 = scmp.ne.s32.totalorder %s138, %s140
      %p144 = scmp.eq.s32.totalorder %s20, 0
      %p145 = por %p143, %p144
      %p146 = scmp.ne.s32.totalorder %s138, %s140
      %p147 = scmp.eq.s32.totalorder %s25, 1
      %p148 = por %p146, %p147
      %p149 = scmp.ne.s32.totalorder %s140, %s141
      %p150 = scmp.eq.s32.totalorder %s25, 0
      %p151 = por %p149, %p150
      %p152 = scmp.ne.s32.totalorder %s140, %s141
      %p153 = scmp.eq.s32.totalorder %s26, 1
      %p154 = por %p152, %p153
      %p156 = scmp.ne.s32.totalorder %s141, %s155
      %p157 = scmp.eq.s32.totalorder %s26, 0
      %p158 = por %p156, %p157
      %s160 = sadd.s32 %s159, 1
      %p163 = scmp.eq.s32.totalorder %s20, 1
      %p164 = scmp.ne.s32.totalorder %s159, %s161
      %p165 = scmp.eq.s32.totalorder %s20, 0
      %p166 = por %p164, %p165
      %p167 = scmp.ne.s32.totalorder %s159, %s161
      %p168 = scmp.eq.s32.totalorder %s25, 1
      %p169 = por %p167, %p168
      %p170 = scmp.ne.s32.totalorder %s161, %s162
      %p171 = scmp.eq.s32.totalorder %s25, 0
      %p172 = por %p170, %p171
      %p173 = scmp.ne.s32.totalorder %s161, %s162
      %p174 = scmp.eq.s32.totalorder %s26, 1
      %p175 = por %p173, %p174
      %p177 = scmp.ne.s32.totalorder %s162, %s176
      %p178 = scmp.eq.s32.totalorder %s26, 0
      %p179 = por %p177, %p178
      %s181 = sadd.s32 %s180, 1
      %p184 = scmp.eq.s32.totalorder %s20, 1
      %p185 = scmp.ne.s32.totalorder %s180, %s182
      %p186 = scmp.eq.s32.totalorder %s20, 0
      %p187 = por %p185, %p186
      %p188 = scmp.ne.s32.totalorder %s180, %s182
      %p189 = scmp.eq.s32.totalorder %s25, 1
      %p190 = por %p188, %p189
      %p191 = scmp.ne.s32.totalorder %s182, %s183
      %p192 = scmp.eq.s32.totalorder %s25, 0
      %p193 = por %p191, %p192
      %p194 = scmp.ne.s32.totalorder %s182, %s183
      %p195 = scmp.eq.s32.totalorder %s26, 1
      %p196 = por %p194, %p195
      %p198 = scmp.ne.s32.totalorder %s183, %s197
      %p199 = scmp.eq.s32.totalorder %s26, 0
      %p200 = por %p198, %p199
      %s202 = sadd.s32 %s201, 1
      %p205 = scmp.eq.s32.totalorder %s20, 1
      %p206 = scmp.ne.s32.totalorder %s201, %s203
      %p207 = scmp.eq.s32.totalorder %s20, 0
      %p208 = por %p206, %p207
      %p209 = scmp.ne.s32.totalorder %s201, %s203
      %p210 = scmp.eq.s32.totalorder %s25, 1
      %p211 = por %p209, %p210
      %p212 = scmp.ne.s32.totalorder %s203, %s204
      %p213 = scmp.eq.s32.totalorder %s25, 0
      %p214 = por %p212, %p213
      %p215 = scmp.ne.s32.totalorder %s203, %s204
      %p216 = scmp.eq.s32.totalorder %s26, 1
      %p217 = por %p215, %p216
      %p219 = scmp.ne.s32.totalorder %s204, %s218
      %p220 = scmp.eq.s32.totalorder %s26, 0
      %p221 = por %p219, %p220
      %s223 = sadd.s32 %s222, 1
      %p226 = scmp.eq.s32.totalorder %s20, 1
      %p227 = scmp.ne.s32.totalorder %s222, %s224
      %p228 = scmp.eq.s32.totalorder %s20, 0
      %p229 = por %p227, %p228
      %p230 = scmp.ne.s32.totalorder %s222, %s224
      %p231 = scmp.eq.s32.totalorder %s25, 1
      %p232 = por %p230, %p231
      %p233 = scmp.ne.s32.totalorder %s224, %s225
      %p234 = scmp.eq.s32.totalorder %s25, 0
      %p235 = por %p233, %p234
      %p236 = scmp.ne.s32.totalorder %s224, %s225
      %p237 = scmp.eq.s32.totalorder %s26, 1
      %p238 = por %p236, %p237
      %p240 = scmp.ne.s32.totalorder %s225, %s239
      %p241 = scmp.eq.s32.totalorder %s26, 0
      %p242 = por %p240, %p241
      %s244 = sadd.s32 %s243, 1
      %p247 = scmp.eq.s32.totalorder %s20, 1
      %p248 = scmp.ne.s32.totalorder %s243, %s245
      %p249 = scmp.eq.s32.totalorder %s20, 0
      %p250 = por %p248, %p249
      %p251 = scmp.ne.s32.totalorder %s243, %s245
      %p252 = scmp.eq.s32.totalorder %s25, 1
      %p253 = por %p251, %p252
      %p254 = scmp.ne.s32.totalorder %s245, %s246
      %p255 = scmp.eq.s32.totalorder %s25, 0
      %p256 = por %p254, %p255
      %p257 = scmp.ne.s32.totalorder %s245, %s246
      %p258 = scmp.eq.s32.totalorder %s26, 1
      %p259 = por %p257, %p258
      %p261 = scmp.ne.s32.totalorder %s246, %s260
      %p262 = scmp.eq.s32.totalorder %s26, 0
      %p263 = por %p261, %p262
      %s264 = ssub.s32 %s20, %s27
      %p265 = scmp.eq.s32.totalorder %s264, 0
      %s267 = sadd.s32 %s266, 1
      %s268 = scalar_select %p265, %s266, %s267
      %p271 = pneg %p265
      %p272 = scmp.eq.s32.totalorder %s20, 1
      %p273 = por %p271, %p272
      %p274 = scmp.ne.s32.totalorder %s266, %s269
      %p275 = scmp.eq.s32.totalorder %s20, 0
      %p276 = por %p274, %p275
      %p277 = scmp.ne.s32.totalorder %s266, %s269
      %p278 = scmp.eq.s32.totalorder %s25, 1
      %p279 = por %p277, %p278
      %p280 = scmp.ne.s32.totalorder %s269, %s270
      %p281 = scmp.eq.s32.totalorder %s25, 0
      %p282 = por %p280, %p281
      %p283 = scmp.ne.s32.totalorder %s269, %s270
      %p284 = scmp.eq.s32.totalorder %s26, 1
      %p285 = por %p283, %p284
      %p287 = scmp.ne.s32.totalorder %s270, %s286
      %p288 = scmp.eq.s32.totalorder %s26, 0
      %p289 = por %p287, %p288
      %p290 = scmp.le.s32.totalorder 1, %s20
      %p291 = scmp.lt.s32.totalorder %s20, 3
      %p292 = pnand %p290, %p291
      %p293 = pneg %p292
      // Predicated region
      $region9: #{tpu_custom_call.1} parent=5 // pred_check
        _
      $region10: #{tpu_custom_call.1} parent=5 // pred_check_branch
        %295 = sbr.rel (%p292) target = $region12
      $region11: #{tpu_custom_call.1} parent=5 // pred_region
        %s296 = ssub.s32 %s20, 1
        // Predicated region
        $region13: #{tpu_custom_call.1} parent=11 // pred_check
          %p297 = pneg %p67
        $region14: #{tpu_custom_call.1} parent=11 // pred_check_branch
          %299 = sbr.rel (%p297) target = $region16
        $region15: #{tpu_custom_call.1} parent=11 // pred_region
          _
        $region16: #{tpu_custom_call.1} parent=11 // pred_fallthru
          _
        // Predicated region
        $region17: #{tpu_custom_call.1} parent=11 // pred_check
          %p300 = pneg %p88
        $region18: #{tpu_custom_call.1} parent=11 // pred_check_branch
          %302 = sbr.rel (%p300) target = $region20
        $region19: #{tpu_custom_call.1} parent=11 // pred_region
          _
        $region20: #{tpu_custom_call.1} parent=11 // pred_fallthru
          _
        // Predicated region
        $region21: #{tpu_custom_call.1} parent=11 // pred_check
          %p303 = pneg %p109
        $region22: #{tpu_custom_call.1} parent=11 // pred_check_branch
          %305 = sbr.rel (%p303) target = $region24
        $region23: #{tpu_custom_call.1} parent=11 // pred_region
          _
        $region24: #{tpu_custom_call.1} parent=11 // pred_fallthru
          _
        // Predicated region
        $region25: #{tpu_custom_call.1} parent=11 // pred_check
          %p306 = pneg %p130
        $region26: #{tpu_custom_call.1} parent=11 // pred_check_branch
          %308 = sbr.rel (%p306) target = $region28
        $region27: #{tpu_custom_call.1} parent=11 // pred_region
          _
        $region28: #{tpu_custom_call.1} parent=11 // pred_fallthru
          _
        // Predicated region
        $region29: #{tpu_custom_call.1} parent=11 // pred_check
          %p309 = pneg %p151
        $region30: #{tpu_custom_call.1} parent=11 // pred_check_branch
          %311 = sbr.rel (%p309) target = $region32
        $region31: #{tpu_custom_call.1} parent=11 // pred_region
          _
        $region32: #{tpu_custom_call.1} parent=11 // pred_fallthru
          _
        // Predicated region
        $region33: #{tpu_custom_call.1} parent=11 // pred_check
          %p312 = pneg %p172
        $region34: #{tpu_custom_call.1} parent=11 // pred_check_branch
          %314 = sbr.rel (%p312) target = $region36
        $region35: #{tpu_custom_call.1} parent=11 // pred_region
          _
        $region36: #{tpu_custom_call.1} parent=11 // pred_fallthru
          _
        // Predicated region
        $region37: #{tpu_custom_call.1} parent=11 // pred_check
          %p315 = pneg %p193
        $region38: #{tpu_custom_call.1} parent=11 // pred_check_branch
          %317 = sbr.rel (%p315) target = $region40
        $region39: #{tpu_custom_call.1} parent=11 // pred_region
          _
        $region40: #{tpu_custom_call.1} parent=11 // pred_fallthru
          _
        // Predicated region
        $region41: #{tpu_custom_call.1} parent=11 // pred_check
          %p318 = pneg %p214
        $region42: #{tpu_custom_call.1} parent=11 // pred_check_branch
          %320 = sbr.rel (%p318) target = $region44
        $region43: #{tpu_custom_call.1} parent=11 // pred_region
          _
        $region44: #{tpu_custom_call.1} parent=11 // pred_fallthru
          _
        // Predicated region
        $region45: #{tpu_custom_call.1} parent=11 // pred_check
          %p321 = pneg %p235
        $region46: #{tpu_custom_call.1} parent=11 // pred_check_branch
          %323 = sbr.rel (%p321) target = $region48
        $region47: #{tpu_custom_call.1} parent=11 // pred_region
          _
        $region48: #{tpu_custom_call.1} parent=11 // pred_fallthru
          _
        // Predicated region
        $region49: #{tpu_custom_call.1} parent=11 // pred_check
          %p324 = pneg %p256
        $region50: #{tpu_custom_call.1} parent=11 // pred_check_branch
          %326 = sbr.rel (%p324) target = $region52
        $region51: #{tpu_custom_call.1} parent=11 // pred_region
          _
        $region52: #{tpu_custom_call.1} parent=11 // pred_fallthru
          _
      $region12: #{tpu_custom_call.1} parent=5 // pred_fallthru
        _
      %p327 = scmp.lt.s32.totalorder %s20, 2
      // Predicated region
      $region53: #{tpu_custom_call.1} parent=5 // pred_check
        %p328 = pneg %p327
      $region54: #{tpu_custom_call.1} parent=5 // pred_check_branch
        %330 = sbr.rel (%p328) target = $region56
      $region55: #{tpu_custom_call.1} parent=5 // pred_region
        // Predicated region
        $region57: #{tpu_custom_call.1} parent=55 // pred_check
          %p331 = pneg %p40
        $region58: #{tpu_custom_call.1} parent=55 // pred_check_branch
          %333 = sbr.rel (%p331) target = $region60
        $region59: #{tpu_custom_call.1} parent=55 // pred_region
          %p334 = scmp.lt.s32.totalorder %s20, 1
          %s335 = scalar_select %p334, %s20, 1
          %s336 = smul.addr %s335, 2
          %s337 = smul.addr %s336, 8
          %s338 = scalar_lea.vmem %s0, %s337
        $region60: #{tpu_custom_call.1} parent=55 // pred_fallthru
          _
      $region56: #{tpu_custom_call.1} parent=5 // pred_fallthru
        _
      %p339 = scmp.le.s32.totalorder 1, %s20
      %p340 = scmp.lt.s32.totalorder %s20, 3
      %p341 = pnand %p339, %p340
      %p342 = pneg %p341
      // Predicated region
      $region61: #{tpu_custom_call.1} parent=5 // pred_check
        _
      $region62: #{tpu_custom_call.1} parent=5 // pred_check_branch
        %344 = sbr.rel (%p341) target = $region64
      $region63: #{tpu_custom_call.1} parent=5 // pred_region
        %s345 = ssub.s32 %s20, 1
        %p346 = scmp.lt.s32.totalorder %s25, 1
        %s347 = scalar_select %p346, %s25, 1
        %s348 = smul.addr %s347, 2
        %s349 = smul.addr %s348, 8
        %s350 = scalar_lea.vmem %s0, %s349
        %p351 = pneg %p46
        %p352 = pneg %p43
        %p353 = pneg %p67
        %p354 = pneg %p64
        %p355 = pneg %p88
        %p356 = pneg %p85
        %p357 = pneg %p109
        %p358 = pneg %p106
        %p359 = pneg %p130
        %p360 = pneg %p127
        %p361 = pneg %p151
        %p362 = pneg %p148
        %p363 = pneg %p172
        %p364 = pneg %p169
        %p365 = pneg %p193
        %p366 = pneg %p190
        %p367 = pneg %p214
        %p368 = pneg %p211
        %p369 = pneg %p235
        %p370 = pneg %p232
        %p371 = pneg %p256
        %p372 = pneg %p253
        %p373 = pneg %p282
        %p374 = pneg %p279
        %s375 = sand.u32 %s269, 1
        %s376 = scalar_lea.sflag [#allocation4], %s375
        %s377 = sand.u32 %s269, 1
        %s378 = smul.addr %s377, 16
        %s379 = scalar_lea.vmem [#allocation3], %s378
        %p380 = scmp.lt.s32.totalorder %s25, 1
        %s381 = scalar_select %p380, %s25, 1
        %s382 = smul.addr %s381, 2
        %s383 = smul.addr %s382, 8
        %s384 = scalar_lea.vmem %s0, %s383
        %vm386 = vcmask 1044464
        %387 = vst.msk [vmem:[#allocation2] sm:$0xf] %vm386, 0
        %388 = vst.msk [vmem:[#allocation2 + $0xc] sm:$0xf] %vm386, 0
        %389 = vst.msk [vmem:[#allocation2 + $0x18] sm:$0xf] %vm386, 0
        %390 = vst.msk [vmem:[#allocation2 + $0x24] sm:$0xf] %vm386, 0
        %vm391 = vcmask 11264
        %392 = vst.msk [vmem:[#allocation2 + $0x8] sm:$0xf] %vm391, 0
        %393 = vst.msk [vmem:[#allocation2 + $0x14] sm:$0xf] %vm391, 0
        %394 = vst.msk [vmem:[#allocation2 + $0x20] sm:$0xf] %vm391, 0
        %395 = vst.msk [vmem:[#allocation2 + $0x2c] sm:$0xf] %vm391, 0
        %v396 = vld [vmem:[%s384] sm:$0xff]
        %v397 = vld [vmem:[%s384 + $0x8] sm:$0xff]
        %v398 = vpack.c.bf16 %v397, %v396
        %v400 = vunpack.c.l.b16 %v398
        %v401 = vunpack.c.h.b16 %v398
        %v402 = vpack.c.b16 %v400, %v400
        %v403 = vpack.c.b16 %v401, %v401
        %406 = vst [vmem:[#allocation2 + $0x4] sm:$0xf] %v402
        %407 = vst [vmem:[#allocation2 + $0x10] sm:$0xf] %v403
        %v408 = vld [vmem:[#allocation2] sm:$0xff]
        %v409 = vld [vmem:[#allocation2 + $0xc] sm:$0xff]
        %v410 = vld [vmem:[#allocation2 + $0x4] sm:$0xf]
        %v411 = vld [vmem:[#allocation2 + $0x10] sm:$0xf]
        %v412 = vld [vmem:[#allocation2 + $0x4] sm:$0xff]
        %v413 = vld [vmem:[#allocation2 + $0x10] sm:$0xff]
        %v416 = vunpack.c.l.b16 %v408
        %v417 = vunpack.c.h.b16 %v408
        %v418 = vunpack.c.l.b16 %v409
        %v419 = vunpack.c.h.b16 %v409
        %v420 = vpack.c.b16 %v418, %v416
        %v421 = vpack.c.b16 %v419, %v417
        %422 = vrot.lane.b32.xlu0 %v420, 127
        %v423 = vpop.permute.xlu0 %422
        %424 = vrot.lane.b32.xlu0 %v421, 127
        %v425 = vpop.permute.xlu0 %424
        %vm426 = vcmask 1039360
        %v427 = vsel %vm426, %v423, %v425
        %v430 = vunpack.c.l.b16 %v410
        %v431 = vunpack.c.l.b16 %v411
        %v432 = vpack.c.b16 %v431, %v430
        %433 = vrot.lane.b32.xlu0 %v432, 126
        %v434 = vpop.permute.xlu0 %433
        %v437 = vunpack.c.l.b16 %v412
        %v438 = vunpack.c.h.b16 %v412
        %v439 = vunpack.c.l.b16 %v413
        %v440 = vunpack.c.h.b16 %v413
        %v441 = vpack.c.b16 %v439, %v437
        %v442 = vpack.c.b16 %v440, %v438
        %443 = vrot.lane.b32.xlu0 %v441, 125
        %v444 = vpop.permute.xlu0 %443
        %445 = vrot.lane.b32.xlu0 %v442, 125
        %v446 = vpop.permute.xlu0 %445
        %vm447 = vcmask 1022976
        %v448 = vsel %vm447, %v444, %v446
        %449 = vrot.lane.b32.xlu0 %v441, 124
        %v450 = vpop.permute.xlu0 %449
        %451 = vrot.lane.b32.xlu0 %v442, 124
        %v452 = vpop.permute.xlu0 %451
        %vm453 = vcmask 1014784
        %v454 = vsel %vm453, %v450, %v452
        %v455 = vld [vmem:[%s1] sm:$0xf]
        %v456 = vld [vmem:[%s1 + $0x4] sm:$0xf]
        %v457 = vld [vmem:[%s1 + $0x8] sm:$0xf]
        %v458 = vld [vmem:[%s1 + $0xc] sm:$0xf]
        %v459 = vld [vmem:[%s2] sm:$0xff]
        %v460 = vld [vmem:[%s2 + $0x8] sm:$0xff]
        %v461 = vld [vmem:[%s2 + $0x10] sm:$0xff]
        %v462 = vld [vmem:[%s2 + $0x18] sm:$0xff]
        %464 = vset.pattern.permute.xlu0 0
        %465 = vperm.xlu0 %464, %v459
        %v466 = vpop.permute.xlu0 %465
        %469 = vset.pattern.permute.xlu0 0
        %470 = vperm.xlu0 %469, %v460
        %v471 = vpop.permute.xlu0 %470
        %474 = vset.pattern.permute.xlu0 0
        %475 = vperm.xlu0 %474, %v461
        %v476 = vpop.permute.xlu0 %475
        %479 = vset.pattern.permute.xlu0 0
        %480 = vperm.xlu0 %479, %v462
        %v481 = vpop.permute.xlu0 %480
        %v487 = vunpack.c.l.b16 %v455
        %v488 = vunpack.c.l.b16 %v456
        %v489 = vunpack.c.l.b16 %v457
        %v490 = vunpack.c.l.b16 %v458
        %v491 = vpack.c.b16 %v488, %v487
        %v492 = vpack.c.b16 %v490, %v489
        %493 = vrot.lane.b32.xlu0 %v420, 2
        %v494 = vpop.permute.xlu0 %493
        %495 = vrot.lane.b32.xlu0 %v421, 2
        %v496 = vpop.permute.xlu0 %495
        %497 = vrot.lane.b32.xlu0 %v427, 2
        %v498 = vpop.permute.xlu0 %497
        %499 = vrot.lane.b32.xlu0 %v425, 2
        %v500 = vpop.permute.xlu0 %499
        %501 = vrot.lane.b32.xlu0 %v434, 2
        %v502 = vpop.permute.xlu0 %501
        %503 = vrot.lane.b32.xlu0 %v444, 2
        %v504 = vpop.permute.xlu0 %503
        %505 = vrot.lane.b32.xlu0 %v448, 2
        %v506 = vpop.permute.xlu0 %505
        %507 = vrot.lane.b32.xlu0 %v450, 2
        %v508 = vpop.permute.xlu0 %507
        %509 = vrot.lane.b32.xlu0 %v454, 2
        %v510 = vpop.permute.xlu0 %509
        %vm511 = vcmask 15360
        %v512 = vsel %vm511, %v494, %v496
        %v513 = vsel %vm511, %v498, %v500
        %v514 = vsel %vm511, %v504, %v506
        %v515 = vsel %vm511, %v508, %v510
        %vm521 = vcmask 654336
        %v523 = vsel %vm521, %v491, 0
        %v526 = vsel %vm521, %v492, 0
        %528 = vmatprep.subr.bf16.mxu0 0
        %529 = vmatpush1.bf16.msra.mxu0 0
        %530 = vmatprep.subr.bf16.mxu0 0
        %531 = vmatpush1.bf16.msra.mxu0 0
        %532 = vmatprep.subr.bf16.mxu0 0
        %533 = vmatpush1.bf16.msra.mxu0 0
        %534 = vmatprep.subr.bf16.mxu0 0
        %535 = vmatpush1.bf16.msra.mxu0 %v515
        %536 = vmatprep.subr.bf16.mxu0 0
        %537 = vmatpush1.bf16.msra.mxu0 %v514
        %538 = vmatprep.subr.bf16.mxu0 0
        %539 = vmatpush1.bf16.msra.mxu0 %v502
        %540 = vmatprep.subr.bf16.mxu0 0
        %541 = vmatpush1.bf16.msra.mxu0 %v513
        %542 = vmatprep.subr.bf16.mxu0 0
        %543 = vmatpush1.bf16.msra.mxu0 %v512
        %544 = vmatprep.subr.bf16.mxu0 0
        %545 = vmatpush2.bf16.msra.mxu0 0
        %546 = vmatprep.subr.bf16.mxu0 0
        %547 = vmatpush2.bf16.msra.mxu0 0
        %548 = vmatprep.subr.bf16.mxu0 0
        %549 = vmatpush2.bf16.msra.mxu0 0
        %550 = vmatprep.subr.bf16.mxu0 0
        %551 = vmatpush2.bf16.msra.mxu0 0
        %552 = vmatprep.subr.bf16.mxu0 0
        %553 = vmatpush2.bf16.msra.mxu0 0
        %554 = vmatprep.subr.bf16.mxu0 0
        %555 = vmatpush2.bf16.msra.mxu0 0
        %556 = vmatprep.subr.bf16.mxu0 0
        %557 = vmatpush2.bf16.msra.mxu0 0
        %558 = vmatprep.subr.bf16.mxu0 0
        %559 = vmatpush2.bf16.msra.mxu0 0
        %560 = vmatprep.mubr.bf16.mxu0 0
        %561 = vmatmul.mubr.bf16.gmra.mxu0 %v523
        %v562 = vpop.f32.mrf.mxu0
        %v563 = vadd.f32 %v466, %v562
        %v564 = vpop.f32.mrf.mxu0
        %v565 = vpop.f32.mrf.mxu0
        %v566 = vadd.f32 %v471, %v565
        %v567 = vpop.f32.mrf.mxu0
        %568 = vmatprep.mubr.bf16.mxu0 0
        %569 = vmatmul.mubr.bf16.gmra.mxu0 %v526
        %v570 = vpop.f32.mrf.mxu0
        %v571 = vadd.f32 %v476, %v570
        %v572 = vpop.f32.mrf.mxu0
        %v573 = vpop.f32.mrf.mxu0
        %v574 = vadd.f32 %v481, %v573
        %v575 = vpop.f32.mrf.mxu0
        %576 = vdwg.mxu0
        %v577 = vtanh.pop %v563
        %v578 = vtanh.pop %v566
        %v579 = vtanh.pop %v571
        %v580 = vtanh.pop %v574
        %v581 = vlaneseq
        %v582 = vand.u32 %v581, 127
        %vm583 = vcmp.lt.s32.totalorder %v582, 24
        %v584 = vsel %vm583, %v577, 0.0
        %v585 = vsel %vm583, %v578, 0.0
        %v586 = vsel %vm583, %v579, 0.0
        %v587 = vsel %vm583, %v580, 0.0
        %v588 = vpack.c.bf16 %v585, %v584
        %v589 = vpack.c.bf16 %v587, %v586
        %v592 = vunpack.c.l.b16 %v588
        %v593 = vunpack.c.h.b16 %v588
        %v594 = vunpack.c.l.b16 %v589
        %v595 = vunpack.c.h.b16 %v589
        %v596 = vpack.c.b16 %v592, %v592
        %v597 = vpack.c.b16 %v593, %v593
        %v598 = vpack.c.b16 %v594, %v594
        %v599 = vpack.c.b16 %v595, %v595
        %604 = vst [vmem:[#allocation2 + $0x4] sm:$0xf] %v596
        %605 = vst [vmem:[#allocation2 + $0x10] sm:$0xf] %v597
        %606 = vst [vmem:[#allocation2 + $0x1c] sm:$0xf] %v598
        %607 = vst [vmem:[#allocation2 + $0x28] sm:$0xf] %v599
        %v608 = vld [vmem:[#allocation2] sm:$0xff]
        %v609 = vld [vmem:[#allocation2 + $0xc] sm:$0xff]
        %v610 = vld [vmem:[#allocation2 + $0x18] sm:$0xff]
        %v611 = vld [vmem:[#allocation2 + $0x24] sm:$0xff]
        %v612 = vld [vmem:[#allocation2 + $0x4] sm:$0xf]
        %v613 = vld [vmem:[#allocation2 + $0x10] sm:$0xf]
        %v614 = vld [vmem:[#allocation2 + $0x1c] sm:$0xf]
        %v615 = vld [vmem:[#allocation2 + $0x28] sm:$0xf]
        %v616 = vld [vmem:[#allocation2 + $0x4] sm:$0xff]
        %v617 = vld [vmem:[#allocation2 + $0x10] sm:$0xff]
        %v618 = vld [vmem:[#allocation2 + $0x1c] sm:$0xff]
        %v619 = vld [vmem:[#allocation2 + $0x28] sm:$0xff]
        %v624 = vunpack.c.l.b16 %v608
        %v625 = vunpack.c.h.b16 %v608
        %v626 = vunpack.c.l.b16 %v609
        %v627 = vunpack.c.h.b16 %v609
        %v628 = vunpack.c.l.b16 %v610
        %v629 = vunpack.c.h.b16 %v610
        %v630 = vunpack.c.l.b16 %v611
        %v631 = vunpack.c.h.b16 %v611
        %v632 = vpack.c.b16 %v626, %v624
        %v633 = vpack.c.b16 %v627, %v625
        %v634 = vpack.c.b16 %v630, %v628
        %v635 = vpack.c.b16 %v631, %v629
        %636 = vrot.lane.b32.xlu0 %v632, 127
        %v637 = vpop.permute.xlu0 %636
        %638 = vrot.lane.b32.xlu0 %v633, 127
        %v639 = vpop.permute.xlu0 %638
        %640 = vrot.lane.b32.xlu0 %v634, 127
        %v641 = vpop.permute.xlu0 %640
        %642 = vrot.lane.b32.xlu0 %v635, 127
        %v643 = vpop.permute.xlu0 %642
        %v644 = vsel %vm426, %v637, %v639
        %v645 = vsel %vm426, %v641, %v643
        %v650 = vunpack.c.l.b16 %v612
        %v651 = vunpack.c.l.b16 %v613
        %v652 = vunpack.c.l.b16 %v614
        %v653 = vunpack.c.l.b16 %v615
        %v654 = vpack.c.b16 %v651, %v650
        %v655 = vpack.c.b16 %v653, %v652
        %656 = vrot.lane.b32.xlu0 %v654, 126
        %v657 = vpop.permute.xlu0 %656
        %658 = vrot.lane.b32.xlu0 %v655, 126
        %v659 = vpop.permute.xlu0 %658
        %v664 = vunpack.c.l.b16 %v616
        %v665 = vunpack.c.h.b16 %v616
        %v666 = vunpack.c.l.b16 %v617
        %v667 = vunpack.c.h.b16 %v617
        %v668 = vunpack.c.l.b16 %v618
        %v669 = vunpack.c.h.b16 %v618
        %v670 = vunpack.c.l.b16 %v619
        %v671 = vunpack.c.h.b16 %v619
        %v672 = vpack.c.b16 %v666, %v664
        %v673 = vpack.c.b16 %v667, %v665
        %v674 = vpack.c.b16 %v670, %v668
        %v675 = vpack.c.b16 %v671, %v669
        %676 = vrot.lane.b32.xlu0 %v672, 125
        %v677 = vpop.permute.xlu0 %676
        %678 = vrot.lane.b32.xlu0 %v673, 125
        %v679 = vpop.permute.xlu0 %678
        %680 = vrot.lane.b32.xlu0 %v674, 125
        %v681 = vpop.permute.xlu0 %680
        %682 = vrot.lane.b32.xlu0 %v675, 125
        %v683 = vpop.permute.xlu0 %682
        %v684 = vsel %vm447, %v677, %v679
        %v685 = vsel %vm447, %v681, %v683
        %686 = vrot.lane.b32.xlu0 %v672, 124
        %v687 = vpop.permute.xlu0 %686
        %688 = vrot.lane.b32.xlu0 %v673, 124
        %v689 = vpop.permute.xlu0 %688
        %690 = vrot.lane.b32.xlu0 %v674, 124
        %v691 = vpop.permute.xlu0 %690
        %692 = vrot.lane.b32.xlu0 %v675, 124
        %v693 = vpop.permute.xlu0 %692
        %v694 = vsel %vm453, %v687, %v689
        %v695 = vsel %vm453, %v691, %v693
        %v696 = vld [vmem:[%s3] sm:$0xff]
        %v697 = vld [vmem:[%s3 + $0x8] sm:$0xff]
        %v698 = vld [vmem:[%s3 + $0x10] sm:$0xff]
        %v699 = vld [vmem:[%s3 + $0x18] sm:$0xff]
        %v700 = vld [vmem:[%s4] sm:$0xff]
        %v701 = vld [vmem:[%s4 + $0x8] sm:$0xff]
        %v702 = vld [vmem:[%s4 + $0x10] sm:$0xff]
        %v703 = vld [vmem:[%s4 + $0x18] sm:$0xff]
        %705 = vset.pattern.permute.xlu0 0
        %706 = vperm.xlu0 %705, %v700
        %v707 = vpop.permute.xlu0 %706
        %710 = vset.pattern.permute.xlu0 0
        %711 = vperm.xlu0 %710, %v701
        %v712 = vpop.permute.xlu0 %711
        %715 = vset.pattern.permute.xlu0 0
        %716 = vperm.xlu0 %715, %v702
        %v717 = vpop.permute.xlu0 %716
        %720 = vset.pattern.permute.xlu0 0
        %721 = vperm.xlu0 %720, %v703
        %v722 = vpop.permute.xlu0 %721
        %v728 = vunpack.c.l.b16 %v696
        %v729 = vunpack.c.h.b16 %v696
        %v730 = vunpack.c.l.b16 %v697
        %v731 = vunpack.c.h.b16 %v697
        %v732 = vunpack.c.l.b16 %v698
        %v733 = vunpack.c.h.b16 %v698
        %v734 = vunpack.c.l.b16 %v699
        %v735 = vunpack.c.h.b16 %v699
        %v736 = vpack.c.b16 %v730, %v728
        %v737 = vpack.c.b16 %v731, %v729
        %v738 = vpack.c.b16 %v734, %v732
        %v739 = vpack.c.b16 %v735, %v733
        %742 = vrot.lane.b32.xlu0 %v632, 2
        %v743 = vpop.permute.xlu0 %742
        %744 = vrot.lane.b32.xlu0 %v633, 2
        %v745 = vpop.permute.xlu0 %744
        %746 = vrot.lane.b32.xlu0 %v634, 2
        %v747 = vpop.permute.xlu0 %746
        %748 = vrot.lane.b32.xlu0 %v635, 2
        %v749 = vpop.permute.xlu0 %748
        %750 = vrot.lane.b32.xlu0 %v644, 2
        %v751 = vpop.permute.xlu0 %750
        %752 = vrot.lane.b32.xlu0 %v639, 2
        %v753 = vpop.permute.xlu0 %752
        %754 = vrot.lane.b32.xlu0 %v645, 2
        %v755 = vpop.permute.xlu0 %754
        %756 = vrot.lane.b32.xlu0 %v643, 2
        %v757 = vpop.permute.xlu0 %756
        %758 = vrot.lane.b32.xlu0 %v657, 2
        %v759 = vpop.permute.xlu0 %758
        %760 = vrot.lane.b32.xlu0 %v659, 2
        %v761 = vpop.permute.xlu0 %760
        %762 = vrot.lane.b32.xlu0 %v677, 2
        %v763 = vpop.permute.xlu0 %762
        %764 = vrot.lane.b32.xlu0 %v684, 2
        %v765 = vpop.permute.xlu0 %764
        %766 = vrot.lane.b32.xlu0 %v681, 2
        %v767 = vpop.permute.xlu0 %766
        %768 = vrot.lane.b32.xlu0 %v685, 2
        %v769 = vpop.permute.xlu0 %768
        %770 = vrot.lane.b32.xlu0 %v687, 2
        %v771 = vpop.permute.xlu0 %770
        %772 = vrot.lane.b32.xlu0 %v694, 2
        %v773 = vpop.permute.xlu0 %772
        %774 = vrot.lane.b32.xlu0 %v691, 2
        %v775 = vpop.permute.xlu0 %774
        %776 = vrot.lane.b32.xlu0 %v695, 2
        %v777 = vpop.permute.xlu0 %776
        %v778 = vsel %vm511, %v743, %v745
        %v779 = vsel %vm511, %v747, %v749
        %v780 = vsel %vm511, %v751, %v753
        %v781 = vsel %vm511, %v755, %v757
        %v782 = vsel %vm511, %v763, %v765
        %v783 = vsel %vm511, %v767, %v769
        %v784 = vsel %vm511, %v771, %v773
        %v785 = vsel %vm511, %v775, %v777
        %vm796 = vcmask 261120
        %v798 = vsel %vm796, %v737, 0
        %v801 = vsel %vm796, %v739, 0
        %803 = vmatprep.subr.bf16.mxu0 0
        %804 = vmatpush1.bf16.msra.mxu0 %v783
        %805 = vmatprep.subr.bf16.mxu0 0
        %806 = vmatpush1.bf16.msra.mxu0 %v782
        %807 = vmatprep.subr.bf16.mxu0 0
        %808 = vmatpush1.bf16.msra.mxu0 %v761
        %809 = vmatprep.subr.bf16.mxu0 0
        %810 = vmatpush1.bf16.msra.mxu0 %v759
        %811 = vmatprep.subr.bf16.mxu0 0
        %812 = vmatpush1.bf16.msra.mxu0 %v781
        %813 = vmatprep.subr.bf16.mxu0 0
        %814 = vmatpush1.bf16.msra.mxu0 %v780
        %815 = vmatprep.subr.bf16.mxu0 0
        %816 = vmatpush1.bf16.msra.mxu0 %v779
        %817 = vmatprep.subr.bf16.mxu0 0
        %818 = vmatpush1.bf16.msra.mxu0 %v778
        %819 = vmatprep.subr.bf16.mxu0 0
        %820 = vmatpush2.bf16.msra.mxu0 0
        %821 = vmatprep.subr.bf16.mxu0 0
        %822 = vmatpush2.bf16.msra.mxu0 0
        %823 = vmatprep.subr.bf16.mxu0 0
        %824 = vmatpush2.bf16.msra.mxu0 0
        %825 = vmatprep.subr.bf16.mxu0 0
        %826 = vmatpush2.bf16.msra.mxu0 0
        %827 = vmatprep.subr.bf16.mxu0 0
        %828 = vmatpush2.bf16.msra.mxu0 0
        %829 = vmatprep.subr.bf16.mxu0 0
        %830 = vmatpush2.bf16.msra.mxu0 0
        %831 = vmatprep.subr.bf16.mxu0 0
        %832 = vmatpush2.bf16.msra.mxu0 %v785
        %833 = vmatprep.subr.bf16.mxu0 0
        %834 = vmatpush2.bf16.msra.mxu0 %v784
        %835 = vmatprep.mubr.bf16.mxu0 %v798
        %836 = vmatmul.mubr.bf16.gmra.mxu0 %v736
        %v837 = vpop.f32.mrf.mxu0
        %v838 = vadd.f32 %v707, %v837
        %v839 = vpop.f32.mrf.mxu0
        %v840 = vpop.f32.mrf.mxu0
        %v841 = vadd.f32 %v712, %v840
        %v842 = vpop.f32.mrf.mxu0
        %843 = vmatprep.mubr.bf16.mxu0 %v801
        %844 = vmatmul.mubr.bf16.gmra.mxu0 %v738
        %v845 = vpop.f32.mrf.mxu0
        %v846 = vadd.f32 %v717, %v845
        %v847 = vpop.f32.mrf.mxu0
        %v848 = vpop.f32.mrf.mxu0
        %v849 = vadd.f32 %v722, %v848
        %v850 = vpop.f32.mrf.mxu0
        %851 = vdwg.mxu0
        %v852 = vtanh.pop %v838
        %v853 = vtanh.pop %v841
        %v854 = vtanh.pop %v846
        %v855 = vtanh.pop %v849
        %v856 = vsel %vm583, %v852, 0.0
        %v857 = vsel %vm583, %v853, 0.0
        %v858 = vsel %vm583, %v854, 0.0
        %v859 = vsel %vm583, %v855, 0.0
        %v860 = vpack.c.bf16 %v857, %v856
        %v861 = vpack.c.bf16 %v859, %v858
        %v864 = vunpack.c.l.b16 %v860
        %v865 = vunpack.c.h.b16 %v860
        %v866 = vunpack.c.l.b16 %v861
        %v867 = vunpack.c.h.b16 %v861
        %v868 = vpack.c.b16 %v864, %v864
        %v869 = vpack.c.b16 %v865, %v865
        %v870 = vpack.c.b16 %v866, %v866
        %v871 = vpack.c.b16 %v867, %v867
        %876 = vst [vmem:[#allocation2 + $0x4] sm:$0xf] %v868
        %877 = vst [vmem:[#allocation2 + $0x10] sm:$0xf] %v869
        %878 = vst [vmem:[#allocation2 + $0x1c] sm:$0xf] %v870
        %879 = vst [vmem:[#allocation2 + $0x28] sm:$0xf] %v871
        %v880 = vld [vmem:[#allocation2] sm:$0xff]
        %v881 = vld [vmem:[#allocation2 + $0xc] sm:$0xff]
        %v882 = vld [vmem:[#allocation2 + $0x18] sm:$0xff]
        %v883 = vld [vmem:[#allocation2 + $0x24] sm:$0xff]
        %v884 = vld [vmem:[#allocation2 + $0x4] sm:$0xf]
        %v885 = vld [vmem:[#allocation2 + $0x10] sm:$0xf]
        %v886 = vld [vmem:[#allocation2 + $0x1c] sm:$0xf]
        %v887 = vld [vmem:[#allocation2 + $0x28] sm:$0xf]
        %v888 = vld [vmem:[#allocation2 + $0x4] sm:$0xff]
        %v889 = vld [vmem:[#allocation2 + $0x10] sm:$0xff]
        %v890 = vld [vmem:[#allocation2 + $0x1c] sm:$0xff]
        %v891 = vld [vmem:[#allocation2 + $0x28] sm:$0xff]
        %v896 = vunpack.c.l.b16 %v880
        %v897 = vunpack.c.h.b16 %v880
        %v898 = vunpack.c.l.b16 %v881
        %v899 = vunpack.c.h.b16 %v881
        %v900 = vunpack.c.l.b16 %v882
        %v901 = vunpack.c.h.b16 %v882
        %v902 = vunpack.c.l.b16 %v883
        %v903 = vunpack.c.h.b16 %v883
        %v904 = vpack.c.b16 %v898, %v896
        %v905 = vpack.c.b16 %v899, %v897
        %v906 = vpack.c.b16 %v902, %v900
        %v907 = vpack.c.b16 %v903, %v901
        %908 = vrot.lane.b32.xlu0 %v904, 127
        %v909 = vpop.permute.xlu0 %908
        %910 = vrot.lane.b32.xlu0 %v905, 127
        %v911 = vpop.permute.xlu0 %910
        %912 = vrot.lane.b32.xlu0 %v906, 127
        %v913 = vpop.permute.xlu0 %912
        %914 = vrot.lane.b32.xlu0 %v907, 127
        %v915 = vpop.permute.xlu0 %914
        %v916 = vsel %vm426, %v909, %v911
        %v917 = vsel %vm426, %v913, %v915
        %v922 = vunpack.c.l.b16 %v884
        %v923 = vunpack.c.l.b16 %v885
        %v924 = vunpack.c.l.b16 %v886
        %v925 = vunpack.c.l.b16 %v887
        %v926 = vpack.c.b16 %v923, %v922
        %v927 = vpack.c.b16 %v925, %v924
        %928 = vrot.lane.b32.xlu0 %v926, 126
        %v929 = vpop.permute.xlu0 %928
        %930 = vrot.lane.b32.xlu0 %v927, 126
        %v931 = vpop.permute.xlu0 %930
        %v936 = vunpack.c.l.b16 %v888
        %v937 = vunpack.c.h.b16 %v888
        %v938 = vunpack.c.l.b16 %v889
        %v939 = vunpack.c.h.b16 %v889
        %v940 = vunpack.c.l.b16 %v890
        %v941 = vunpack.c.h.b16 %v890
        %v942 = vunpack.c.l.b16 %v891
        %v943 = vunpack.c.h.b16 %v891
        %v944 = vpack.c.b16 %v938, %v936
        %v945 = vpack.c.b16 %v939, %v937
        %v946 = vpack.c.b16 %v942, %v940
        %v947 = vpack.c.b16 %v943, %v941
        %948 = vrot.lane.b32.xlu0 %v944, 125
        %v949 = vpop.permute.xlu0 %948
        %950 = vrot.lane.b32.xlu0 %v945, 125
        %v951 = vpop.permute.xlu0 %950
        %952 = vrot.lane.b32.xlu0 %v946, 125
        %v953 = vpop.permute.xlu0 %952
        %954 = vrot.lane.b32.xlu0 %v947, 125
        %v955 = vpop.permute.xlu0 %954
        %v956 = vsel %vm447, %v949, %v951
        %v957 = vsel %vm447, %v953, %v955
        %958 = vrot.lane.b32.xlu0 %v944, 124
        %v959 = vpop.permute.xlu0 %958
        %960 = vrot.lane.b32.xlu0 %v945, 124
        %v961 = vpop.permute.xlu0 %960
        %962 = vrot.lane.b32.xlu0 %v946, 124
        %v963 = vpop.permute.xlu0 %962
        %964 = vrot.lane.b32.xlu0 %v947, 124
        %v965 = vpop.permute.xlu0 %964
        %v966 = vsel %vm453, %v959, %v961
        %v967 = vsel %vm453, %v963, %v965
        %v968 = vld [vmem:[%s5] sm:$0xff]
        %v969 = vld [vmem:[%s5 + $0x8] sm:$0xff]
        %v970 = vld [vmem:[%s5 + $0x10] sm:$0xff]
        %v971 = vld [vmem:[%s5 + $0x18] sm:$0xff]
        %v972 = vld [vmem:[%s6] sm:$0xff]
        %v973 = vld [vmem:[%s6 + $0x8] sm:$0xff]
        %v974 = vld [vmem:[%s6 + $0x10] sm:$0xff]
        %v975 = vld [vmem:[%s6 + $0x18] sm:$0xff]
        %977 = vset.pattern.permute.xlu0 0
        %978 = vperm.xlu0 %977, %v972
        %v979 = vpop.permute.xlu0 %978
        %982 = vset.pattern.permute.xlu0 0
        %983 = vperm.xlu0 %982, %v973
        %v984 = vpop.permute.xlu0 %983
        %987 = vset.pattern.permute.xlu0 0
        %988 = vperm.xlu0 %987, %v974
        %v989 = vpop.permute.xlu0 %988
        %992 = vset.pattern.permute.xlu0 0
        %993 = vperm.xlu0 %992, %v975
        %v994 = vpop.permute.xlu0 %993
        %v1000 = vunpack.c.l.b16 %v968
        %v1001 = vunpack.c.h.b16 %v968
        %v1002 = vunpack.c.l.b16 %v969
        %v1003 = vunpack.c.h.b16 %v969
        %v1004 = vunpack.c.l.b16 %v970
        %v1005 = vunpack.c.h.b16 %v970
        %v1006 = vunpack.c.l.b16 %v971
        %v1007 = vunpack.c.h.b16 %v971
        %v1008 = vpack.c.b16 %v1002, %v1000
        %v1009 = vpack.c.b16 %v1003, %v1001
        %v1010 = vpack.c.b16 %v1006, %v1004
        %v1011 = vpack.c.b16 %v1007, %v1005
        %1014 = vrot.lane.b32.xlu0 %v904, 2
        %v1015 = vpop.permute.xlu0 %1014
        %1016 = vrot.lane.b32.xlu0 %v905, 2
        %v1017 = vpop.permute.xlu0 %1016
        %1018 = vrot.lane.b32.xlu0 %v906, 2
        %v1019 = vpop.permute.xlu0 %1018
        %1020 = vrot.lane.b32.xlu0 %v907, 2
        %v1021 = vpop.permute.xlu0 %1020
        %1022 = vrot.lane.b32.xlu0 %v916, 2
        %v1023 = vpop.permute.xlu0 %1022
        %1024 = vrot.lane.b32.xlu0 %v911, 2
        %v1025 = vpop.permute.xlu0 %1024
        %1026 = vrot.lane.b32.xlu0 %v917, 2
        %v1027 = vpop.permute.xlu0 %1026
        %1028 = vrot.lane.b32.xlu0 %v915, 2
        %v1029 = vpop.permute.xlu0 %1028
        %1030 = vrot.lane.b32.xlu0 %v929, 2
        %v1031 = vpop.permute.xlu0 %1030
        %1032 = vrot.lane.b32.xlu0 %v931, 2
        %v1033 = vpop.permute.xlu0 %1032
        %1034 = vrot.lane.b32.xlu0 %v949, 2
        %v1035 = vpop.permute.xlu0 %1034
        %1036 = vrot.lane.b32.xlu0 %v956, 2
        %v1037 = vpop.permute.xlu0 %1036
        %1038 = vrot.lane.b32.xlu0 %v953, 2
        %v1039 = vpop.permute.xlu0 %1038
        %1040 = vrot.lane.b32.xlu0 %v957, 2
        %v1041 = vpop.permute.xlu0 %1040
        %1042 = vrot.lane.b32.xlu0 %v959, 2
        %v1043 = vpop.permute.xlu0 %1042
        %1044 = vrot.lane.b32.xlu0 %v966, 2
        %v1045 = vpop.permute.xlu0 %1044
        %1046 = vrot.lane.b32.xlu0 %v963, 2
        %v1047 = vpop.permute.xlu0 %1046
        %1048 = vrot.lane.b32.xlu0 %v967, 2
        %v1049 = vpop.permute.xlu0 %1048
        %v1050 = vsel %vm511, %v1015, %v1017
        %v1051 = vsel %vm511, %v1019, %v1021
        %v1052 = vsel %vm511, %v1023, %v1025
        %v1053 = vsel %vm511, %v1027, %v1029
        %v1054 = vsel %vm511, %v1035, %v1037
        %v1055 = vsel %vm511, %v1039, %v1041
        %v1056 = vsel %vm511, %v1043, %v1045
        %v1057 = vsel %vm511, %v1047, %v1049
        %v1069 = vsel %vm796, %v1009, 0
        %v1072 = vsel %vm796, %v1011, 0
        %1074 = vmatprep.subr.bf16.mxu0 0
        %1075 = vmatpush1.bf16.msra.mxu0 %v1055
        %1076 = vmatprep.subr.bf16.mxu0 0
        %1077 = vmatpush1.bf16.msra.mxu0 %v1054
        %1078 = vmatprep.subr.bf16.mxu0 0
        %1079 = vmatpush1.bf16.msra.mxu0 %v1033
        %1080 = vmatprep.subr.bf16.mxu0 0
        %1081 = vmatpush1.bf16.msra.mxu0 %v1031
        %1082 = vmatprep.subr.bf16.mxu0 0
        %1083 = vmatpush1.bf16.msra.mxu0 %v1053
        %1084 = vmatprep.subr.bf16.mxu0 0
        %1085 = vmatpush1.bf16.msra.mxu0 %v1052
        %1086 = vmatprep.subr.bf16.mxu0 0
        %1087 = vmatpush1.bf16.msra.mxu0 %v1051
        %1088 = vmatprep.subr.bf16.mxu0 0
        %1089 = vmatpush1.bf16.msra.mxu0 %v1050
        %1090 = vmatprep.subr.bf16.mxu0 0
        %1091 = vmatpush2.bf16.msra.mxu0 0
        %1092 = vmatprep.subr.bf16.mxu0 0
        %1093 = vmatpush2.bf16.msra.mxu0 0
        %1094 = vmatprep.subr.bf16.mxu0 0
        %1095 = vmatpush2.bf16.msra.mxu0 0
        %1096 = vmatprep.subr.bf16.mxu0 0
        %1097 = vmatpush2.bf16.msra.mxu0 0
        %1098 = vmatprep.subr.bf16.mxu0 0
        %1099 = vmatpush2.bf16.msra.mxu0 0
        %1100 = vmatprep.subr.bf16.mxu0 0
        %1101 = vmatpush2.bf16.msra.mxu0 0
        %1102 = vmatprep.subr.bf16.mxu0 0
        %1103 = vmatpush2.bf16.msra.mxu0 %v1057
        %1104 = vmatprep.subr.bf16.mxu0 0
        %1105 = vmatpush2.bf16.msra.mxu0 %v1056
        %1106 = vmatprep.mubr.bf16.mxu0 %v1069
        %1107 = vmatmul.mubr.bf16.gmra.mxu0 %v1008
        %v1108 = vpop.f32.mrf.mxu0
        %v1109 = vadd.f32 %v979, %v1108
        %v1110 = vpop.f32.mrf.mxu0
        %v1111 = vpop.f32.mrf.mxu0
        %v1112 = vadd.f32 %v984, %v1111
        %v1113 = vpop.f32.mrf.mxu0
        %1114 = vmatprep.mubr.bf16.mxu0 %v1072
        %1115 = vmatmul.mubr.bf16.gmra.mxu0 %v1010
        %v1116 = vpop.f32.mrf.mxu0
        %v1117 = vadd.f32 %v989, %v1116
        %v1118 = vpop.f32.mrf.mxu0
        %v1119 = vpop.f32.mrf.mxu0
        %v1120 = vadd.f32 %v994, %v1119
        %v1121 = vpop.f32.mrf.mxu0
        %1122 = vdwg.mxu0
        %v1123 = vtanh.pop %v1109
        %v1124 = vtanh.pop %v1112
        %v1125 = vtanh.pop %v1117
        %v1126 = vtanh.pop %v1120
        %v1127 = vsel %vm583, %v1123, 0.0
        %v1128 = vsel %vm583, %v1124, 0.0
        %v1129 = vsel %vm583, %v1125, 0.0
        %v1130 = vsel %vm583, %v1126, 0.0
        %v1131 = vpack.c.bf16 %v1128, %v1127
        %v1132 = vpack.c.bf16 %v1130, %v1129
        %v1135 = vunpack.c.l.b16 %v1131
        %v1136 = vunpack.c.h.b16 %v1131
        %v1137 = vunpack.c.l.b16 %v1132
        %v1138 = vunpack.c.h.b16 %v1132
        %v1139 = vpack.c.b16 %v1135, %v1135
        %v1140 = vpack.c.b16 %v1136, %v1136
        %v1141 = vpack.c.b16 %v1137, %v1137
        %v1142 = vpack.c.b16 %v1138, %v1138
        %1147 = vst [vmem:[#allocation2 + $0x4] sm:$0xf] %v1139
        %1148 = vst [vmem:[#allocation2 + $0x10] sm:$0xf] %v1140
        %1149 = vst [vmem:[#allocation2 + $0x1c] sm:$0xf] %v1141
        %1150 = vst [vmem:[#allocation2 + $0x28] sm:$0xf] %v1142
        %v1151 = vld [vmem:[#allocation2] sm:$0xff]
        %v1152 = vld [vmem:[#allocation2 + $0xc] sm:$0xff]
        %v1153 = vld [vmem:[#allocation2 + $0x18] sm:$0xff]
        %v1154 = vld [vmem:[#allocation2 + $0x24] sm:$0xff]
        %v1155 = vld [vmem:[#allocation2 + $0x4] sm:$0xf]
        %v1156 = vld [vmem:[#allocation2 + $0x10] sm:$0xf]
        %v1157 = vld [vmem:[#allocation2 + $0x1c] sm:$0xf]
        %v1158 = vld [vmem:[#allocation2 + $0x28] sm:$0xf]
        %v1159 = vld [vmem:[#allocation2 + $0x4] sm:$0xff]
        %v1160 = vld [vmem:[#allocation2 + $0x10] sm:$0xff]
        %v1161 = vld [vmem:[#allocation2 + $0x1c] sm:$0xff]
        %v1162 = vld [vmem:[#allocation2 + $0x28] sm:$0xff]
        %v1167 = vunpack.c.l.b16 %v1151
        %v1168 = vunpack.c.h.b16 %v1151
        %v1169 = vunpack.c.l.b16 %v1152
        %v1170 = vunpack.c.h.b16 %v1152
        %v1171 = vunpack.c.l.b16 %v1153
        %v1172 = vunpack.c.h.b16 %v1153
        %v1173 = vunpack.c.l.b16 %v1154
        %v1174 = vunpack.c.h.b16 %v1154
        %v1175 = vpack.c.b16 %v1169, %v1167
        %v1176 = vpack.c.b16 %v1170, %v1168
        %v1177 = vpack.c.b16 %v1173, %v1171
        %v1178 = vpack.c.b16 %v1174, %v1172
        %1179 = vrot.lane.b32.xlu0 %v1175, 127
        %v1180 = vpop.permute.xlu0 %1179
        %1181 = vrot.lane.b32.xlu0 %v1176, 127
        %v1182 = vpop.permute.xlu0 %1181
        %1183 = vrot.lane.b32.xlu0 %v1177, 127
        %v1184 = vpop.permute.xlu0 %1183
        %1185 = vrot.lane.b32.xlu0 %v1178, 127
        %v1186 = vpop.permute.xlu0 %1185
        %v1187 = vsel %vm426, %v1180, %v1182
        %v1188 = vsel %vm426, %v1184, %v1186
        %v1193 = vunpack.c.l.b16 %v1155
        %v1194 = vunpack.c.l.b16 %v1156
        %v1195 = vunpack.c.l.b16 %v1157
        %v1196 = vunpack.c.l.b16 %v1158
        %v1197 = vpack.c.b16 %v1194, %v1193
        %v1198 = vpack.c.b16 %v1196, %v1195
        %1199 = vrot.lane.b32.xlu0 %v1197, 126
        %v1200 = vpop.permute.xlu0 %1199
        %1201 = vrot.lane.b32.xlu0 %v1198, 126
        %v1202 = vpop.permute.xlu0 %1201
        %v1207 = vunpack.c.l.b16 %v1159
        %v1208 = vunpack.c.h.b16 %v1159
        %v1209 = vunpack.c.l.b16 %v1160
        %v1210 = vunpack.c.h.b16 %v1160
        %v1211 = vunpack.c.l.b16 %v1161
        %v1212 = vunpack.c.h.b16 %v1161
        %v1213 = vunpack.c.l.b16 %v1162
        %v1214 = vunpack.c.h.b16 %v1162
        %v1215 = vpack.c.b16 %v1209, %v1207
        %v1216 = vpack.c.b16 %v1210, %v1208
        %v1217 = vpack.c.b16 %v1213, %v1211
        %v1218 = vpack.c.b16 %v1214, %v1212
        %1219 = vrot.lane.b32.xlu0 %v1215, 125
        %v1220 = vpop.permute.xlu0 %1219
        %1221 = vrot.lane.b32.xlu0 %v1216, 125
        %v1222 = vpop.permute.xlu0 %1221
        %1223 = vrot.lane.b32.xlu0 %v1217, 125
        %v1224 = vpop.permute.xlu0 %1223
        %1225 = vrot.lane.b32.xlu0 %v1218, 125
        %v1226 = vpop.permute.xlu0 %1225
        %v1227 = vsel %vm447, %v1220, %v1222
        %v1228 = vsel %vm447, %v1224, %v1226
        %1229 = vrot.lane.b32.xlu0 %v1215, 124
        %v1230 = vpop.permute.xlu0 %1229
        %1231 = vrot.lane.b32.xlu0 %v1216, 124
        %v1232 = vpop.permute.xlu0 %1231
        %1233 = vrot.lane.b32.xlu0 %v1217, 124
        %v1234 = vpop.permute.xlu0 %1233
        %1235 = vrot.lane.b32.xlu0 %v1218, 124
        %v1236 = vpop.permute.xlu0 %1235
        %v1237 = vsel %vm453, %v1230, %v1232
        %v1238 = vsel %vm453, %v1234, %v1236
        %v1239 = vld [vmem:[%s7] sm:$0xff]
        %v1240 = vld [vmem:[%s7 + $0x8] sm:$0xff]
        %v1241 = vld [vmem:[%s7 + $0x10] sm:$0xff]
        %v1242 = vld [vmem:[%s7 + $0x18] sm:$0xff]
        %v1243 = vld [vmem:[%s8] sm:$0xff]
        %v1244 = vld [vmem:[%s8 + $0x8] sm:$0xff]
        %v1245 = vld [vmem:[%s8 + $0x10] sm:$0xff]
        %v1246 = vld [vmem:[%s8 + $0x18] sm:$0xff]
        %1248 = vset.pattern.permute.xlu0 0
        %1249 = vperm.xlu0 %1248, %v1243
        %v1250 = vpop.permute.xlu0 %1249
        %1253 = vset.pattern.permute.xlu0 0
        %1254 = vperm.xlu0 %1253, %v1244
        %v1255 = vpop.permute.xlu0 %1254
        %1258 = vset.pattern.permute.xlu0 0
        %1259 = vperm.xlu0 %1258, %v1245
        %v1260 = vpop.permute.xlu0 %1259
        %1263 = vset.pattern.permute.xlu0 0
        %1264 = vperm.xlu0 %1263, %v1246
        %v1265 = vpop.permute.xlu0 %1264
        %v1271 = vunpack.c.l.b16 %v1239
        %v1272 = vunpack.c.h.b16 %v1239
        %v1273 = vunpack.c.l.b16 %v1240
        %v1274 = vunpack.c.h.b16 %v1240
        %v1275 = vunpack.c.l.b16 %v1241
        %v1276 = vunpack.c.h.b16 %v1241
        %v1277 = vunpack.c.l.b16 %v1242
        %v1278 = vunpack.c.h.b16 %v1242
        %v1279 = vpack.c.b16 %v1273, %v1271
        %v1280 = vpack.c.b16 %v1274, %v1272
        %v1281 = vpack.c.b16 %v1277, %v1275
        %v1282 = vpack.c.b16 %v1278, %v1276
        %1285 = vrot.lane.b32.xlu0 %v1175, 2
        %v1286 = vpop.permute.xlu0 %1285
        %1287 = vrot.lane.b32.xlu0 %v1176, 2
        %v1288 = vpop.permute.xlu0 %1287
        %1289 = vrot.lane.b32.xlu0 %v1177, 2
        %v1290 = vpop.permute.xlu0 %1289
        %1291 = vrot.lane.b32.xlu0 %v1178, 2
        %v1292 = vpop.permute.xlu0 %1291
        %1293 = vrot.lane.b32.xlu0 %v1187, 2
        %v1294 = vpop.permute.xlu0 %1293
        %1295 = vrot.lane.b32.xlu0 %v1182, 2
        %v1296 = vpop.permute.xlu0 %1295
        %1297 = vrot.lane.b32.xlu0 %v1188, 2
        %v1298 = vpop.permute.xlu0 %1297
        %1299 = vrot.lane.b32.xlu0 %v1186, 2
        %v1300 = vpop.permute.xlu0 %1299
        %1301 = vrot.lane.b32.xlu0 %v1200, 2
        %v1302 = vpop.permute.xlu0 %1301
        %1303 = vrot.lane.b32.xlu0 %v1202, 2
        %v1304 = vpop.permute.xlu0 %1303
        %1305 = vrot.lane.b32.xlu0 %v1220, 2
        %v1306 = vpop.permute.xlu0 %1305
        %1307 = vrot.lane.b32.xlu0 %v1227, 2
        %v1308 = vpop.permute.xlu0 %1307
        %1309 = vrot.lane.b32.xlu0 %v1224, 2
        %v1310 = vpop.permute.xlu0 %1309
        %1311 = vrot.lane.b32.xlu0 %v1228, 2
        %v1312 = vpop.permute.xlu0 %1311
        %1313 = vrot.lane.b32.xlu0 %v1230, 2
        %v1314 = vpop.permute.xlu0 %1313
        %1315 = vrot.lane.b32.xlu0 %v1237, 2
        %v1316 = vpop.permute.xlu0 %1315
        %1317 = vrot.lane.b32.xlu0 %v1234, 2
        %v1318 = vpop.permute.xlu0 %1317
        %1319 = vrot.lane.b32.xlu0 %v1238, 2
        %v1320 = vpop.permute.xlu0 %1319
        %v1321 = vsel %vm511, %v1286, %v1288
        %v1322 = vsel %vm511, %v1290, %v1292
        %v1323 = vsel %vm511, %v1294, %v1296
        %v1324 = vsel %vm511, %v1298, %v1300
        %v1325 = vsel %vm511, %v1306, %v1308
        %v1326 = vsel %vm511, %v1310, %v1312
        %v1327 = vsel %vm511, %v1314, %v1316
        %v1328 = vsel %vm511, %v1318, %v1320
        %v1340 = vsel %vm796, %v1280, 0
        %v1343 = vsel %vm796, %v1282, 0
        %1345 = vmatprep.subr.bf16.mxu0 0
        %1346 = vmatpush1.bf16.msra.mxu0 %v1326
        %1347 = vmatprep.subr.bf16.mxu0 0
        %1348 = vmatpush1.bf16.msra.mxu0 %v1325
        %1349 = vmatprep.subr.bf16.mxu0 0
        %1350 = vmatpush1.bf16.msra.mxu0 %v1304
        %1351 = vmatprep.subr.bf16.mxu0 0
        %1352 = vmatpush1.bf16.msra.mxu0 %v1302
        %1353 = vmatprep.subr.bf16.mxu0 0
        %1354 = vmatpush1.bf16.msra.mxu0 %v1324
        %1355 = vmatprep.subr.bf16.mxu0 0
        %1356 = vmatpush1.bf16.msra.mxu0 %v1323
        %1357 = vmatprep.subr.bf16.mxu0 0
        %1358 = vmatpush1.bf16.msra.mxu0 %v1322
        %1359 = vmatprep.subr.bf16.mxu0 0
        %1360 = vmatpush1.bf16.msra.mxu0 %v1321
        %1361 = vmatprep.subr.bf16.mxu0 0
        %1362 = vmatpush2.bf16.msra.mxu0 0
        %1363 = vmatprep.subr.bf16.mxu0 0
        %1364 = vmatpush2.bf16.msra.mxu0 0
        %1365 = vmatprep.subr.bf16.mxu0 0
        %1366 = vmatpush2.bf16.msra.mxu0 0
        %1367 = vmatprep.subr.bf16.mxu0 0
        %1368 = vmatpush2.bf16.msra.mxu0 0
        %1369 = vmatprep.subr.bf16.mxu0 0
        %1370 = vmatpush2.bf16.msra.mxu0 0
        %1371 = vmatprep.subr.bf16.mxu0 0
        %1372 = vmatpush2.bf16.msra.mxu0 0
        %1373 = vmatprep.subr.bf16.mxu0 0
        %1374 = vmatpush2.bf16.msra.mxu0 %v1328
        %1375 = vmatprep.subr.bf16.mxu0 0
        %1376 = vmatpush2.bf16.msra.mxu0 %v1327
        %1377 = vmatprep.mubr.bf16.mxu0 %v1340
        %1378 = vmatmul.mubr.bf16.gmra.mxu0 %v1279
        %v1379 = vpop.f32.mrf.mxu0
        %v1380 = vadd.f32 %v1250, %v1379
        %v1381 = vpop.f32.mrf.mxu0
        %v1382 = vpop.f32.mrf.mxu0
        %v1383 = vadd.f32 %v1255, %v1382
        %v1384 = vpop.f32.mrf.mxu0
        %1385 = vmatprep.mubr.bf16.mxu0 %v1343
        %1386 = vmatmul.mubr.bf16.gmra.mxu0 %v1281
        %v1387 = vpop.f32.mrf.mxu0
        %v1388 = vadd.f32 %v1260, %v1387
        %v1389 = vpop.f32.mrf.mxu0
        %v1390 = vpop.f32.mrf.mxu0
        %v1391 = vadd.f32 %v1265, %v1390
        %v1392 = vpop.f32.mrf.mxu0
        %1393 = vdwg.mxu0
        %v1394 = vtanh.pop %v1380
        %v1395 = vtanh.pop %v1383
        %v1396 = vtanh.pop %v1388
        %v1397 = vtanh.pop %v1391
        %v1398 = vsel %vm583, %v1394, 0.0
        %v1399 = vsel %vm583, %v1395, 0.0
        %v1400 = vsel %vm583, %v1396, 0.0
        %v1401 = vsel %vm583, %v1397, 0.0
        %v1402 = vpack.c.bf16 %v1399, %v1398
        %v1403 = vpack.c.bf16 %v1401, %v1400
        %v1406 = vunpack.c.l.b16 %v1402
        %v1407 = vunpack.c.h.b16 %v1402
        %v1408 = vunpack.c.l.b16 %v1403
        %v1409 = vunpack.c.h.b16 %v1403
        %v1410 = vpack.c.b16 %v1406, %v1406
        %v1411 = vpack.c.b16 %v1407, %v1407
        %v1412 = vpack.c.b16 %v1408, %v1408
        %v1413 = vpack.c.b16 %v1409, %v1409
        %1418 = vst [vmem:[#allocation2 + $0x4] sm:$0xf] %v1410
        %1419 = vst [vmem:[#allocation2 + $0x10] sm:$0xf] %v1411
        %1420 = vst [vmem:[#allocation2 + $0x1c] sm:$0xf] %v1412
        %1421 = vst [vmem:[#allocation2 + $0x28] sm:$0xf] %v1413
        %v1422 = vld [vmem:[#allocation2] sm:$0xff]
        %v1423 = vld [vmem:[#allocation2 + $0xc] sm:$0xff]
        %v1424 = vld [vmem:[#allocation2 + $0x18] sm:$0xff]
        %v1425 = vld [vmem:[#allocation2 + $0x24] sm:$0xff]
        %v1426 = vld [vmem:[#allocation2 + $0x4] sm:$0xf]
        %v1427 = vld [vmem:[#allocation2 + $0x10] sm:$0xf]
        %v1428 = vld [vmem:[#allocation2 + $0x1c] sm:$0xf]
        %v1429 = vld [vmem:[#allocation2 + $0x28] sm:$0xf]
        %v1430 = vld [vmem:[#allocation2 + $0x4] sm:$0xff]
        %v1431 = vld [vmem:[#allocation2 + $0x10] sm:$0xff]
        %v1432 = vld [vmem:[#allocation2 + $0x1c] sm:$0xff]
        %v1433 = vld [vmem:[#allocation2 + $0x28] sm:$0xff]
        %v1438 = vunpack.c.l.b16 %v1422
        %v1439 = vunpack.c.h.b16 %v1422
        %v1440 = vunpack.c.l.b16 %v1423
        %v1441 = vunpack.c.h.b16 %v1423
        %v1442 = vunpack.c.l.b16 %v1424
        %v1443 = vunpack.c.h.b16 %v1424
        %v1444 = vunpack.c.l.b16 %v1425
        %v1445 = vunpack.c.h.b16 %v1425
        %v1446 = vpack.c.b16 %v1440, %v1438
        %v1447 = vpack.c.b16 %v1441, %v1439
        %v1448 = vpack.c.b16 %v1444, %v1442
        %v1449 = vpack.c.b16 %v1445, %v1443
        %1450 = vrot.lane.b32.xlu0 %v1446, 127
        %v1451 = vpop.permute.xlu0 %1450
        %1452 = vrot.lane.b32.xlu0 %v1447, 127
        %v1453 = vpop.permute.xlu0 %1452
        %1454 = vrot.lane.b32.xlu0 %v1448, 127
        %v1455 = vpop.permute.xlu0 %1454
        %1456 = vrot.lane.b32.xlu0 %v1449, 127
        %v1457 = vpop.permute.xlu0 %1456
        %v1458 = vsel %vm426, %v1451, %v1453
        %v1459 = vsel %vm426, %v1455, %v1457
        %v1464 = vunpack.c.l.b16 %v1426
        %v1465 = vunpack.c.l.b16 %v1427
        %v1466 = vunpack.c.l.b16 %v1428
        %v1467 = vunpack.c.l.b16 %v1429
        %v1468 = vpack.c.b16 %v1465, %v1464
        %v1469 = vpack.c.b16 %v1467, %v1466
        %1470 = vrot.lane.b32.xlu0 %v1468, 126
        %v1471 = vpop.permute.xlu0 %1470
        %1472 = vrot.lane.b32.xlu0 %v1469, 126
        %v1473 = vpop.permute.xlu0 %1472
        %v1478 = vunpack.c.l.b16 %v1430
        %v1479 = vunpack.c.h.b16 %v1430
        %v1480 = vunpack.c.l.b16 %v1431
        %v1481 = vunpack.c.h.b16 %v1431
        %v1482 = vunpack.c.l.b16 %v1432
        %v1483 = vunpack.c.h.b16 %v1432
        %v1484 = vunpack.c.l.b16 %v1433
        %v1485 = vunpack.c.h.b16 %v1433
        %v1486 = vpack.c.b16 %v1480, %v1478
        %v1487 = vpack.c.b16 %v1481, %v1479
        %v1488 = vpack.c.b16 %v1484, %v1482
        %v1489 = vpack.c.b16 %v1485, %v1483
        %1490 = vrot.lane.b32.xlu0 %v1486, 125
        %v1491 = vpop.permute.xlu0 %1490
        %1492 = vrot.lane.b32.xlu0 %v1487, 125
        %v1493 = vpop.permute.xlu0 %1492
        %1494 = vrot.lane.b32.xlu0 %v1488, 125
        %v1495 = vpop.permute.xlu0 %1494
        %1496 = vrot.lane.b32.xlu0 %v1489, 125
        %v1497 = vpop.permute.xlu0 %1496
        %v1498 = vsel %vm447, %v1491, %v1493
        %v1499 = vsel %vm447, %v1495, %v1497
        %1500 = vrot.lane.b32.xlu0 %v1486, 124
        %v1501 = vpop.permute.xlu0 %1500
        %1502 = vrot.lane.b32.xlu0 %v1487, 124
        %v1503 = vpop.permute.xlu0 %1502
        %1504 = vrot.lane.b32.xlu0 %v1488, 124
        %v1505 = vpop.permute.xlu0 %1504
        %1506 = vrot.lane.b32.xlu0 %v1489, 124
        %v1507 = vpop.permute.xlu0 %1506
        %v1508 = vsel %vm453, %v1501, %v1503
        %v1509 = vsel %vm453, %v1505, %v1507
        %v1510 = vld [vmem:[%s9] sm:$0xff]
        %v1511 = vld [vmem:[%s9 + $0x8] sm:$0xff]
        %v1512 = vld [vmem:[%s10] sm:$0xff]
        %v1513 = vld [vmem:[%s10 + $0x8] sm:$0xff]
        %1515 = vset.pattern.permute.xlu0 0
        %1516 = vperm.xlu0 %1515, %v1512
        %v1517 = vpop.permute.xlu0 %1516
        %1520 = vset.pattern.permute.xlu0 0
        %1521 = vperm.xlu0 %1520, %v1513
        %v1522 = vpop.permute.xlu0 %1521
        %v1526 = vunpack.c.l.b16 %v1510
        %v1527 = vunpack.c.h.b16 %v1510
        %v1528 = vunpack.c.l.b16 %v1511
        %v1529 = vunpack.c.h.b16 %v1511
        %v1530 = vpack.c.b16 %v1528, %v1526
        %v1531 = vpack.c.b16 %v1529, %v1527
        %1533 = vrot.lane.b32.xlu0 %v1446, 2
        %v1534 = vpop.permute.xlu0 %1533
        %1535 = vrot.lane.b32.xlu0 %v1447, 2
        %v1536 = vpop.permute.xlu0 %1535
        %1537 = vrot.lane.b32.xlu0 %v1448, 2
        %v1538 = vpop.permute.xlu0 %1537
        %1539 = vrot.lane.b32.xlu0 %v1449, 2
        %v1540 = vpop.permute.xlu0 %1539
        %1541 = vrot.lane.b32.xlu0 %v1458, 2
        %v1542 = vpop.permute.xlu0 %1541
        %1543 = vrot.lane.b32.xlu0 %v1453, 2
        %v1544 = vpop.permute.xlu0 %1543
        %1545 = vrot.lane.b32.xlu0 %v1459, 2
        %v1546 = vpop.permute.xlu0 %1545
        %1547 = vrot.lane.b32.xlu0 %v1457, 2
        %v1548 = vpop.permute.xlu0 %1547
        %1549 = vrot.lane.b32.xlu0 %v1471, 2
        %v1550 = vpop.permute.xlu0 %1549
        %1551 = vrot.lane.b32.xlu0 %v1473, 2
        %v1552 = vpop.permute.xlu0 %1551
        %1553 = vrot.lane.b32.xlu0 %v1491, 2
        %v1554 = vpop.permute.xlu0 %1553
        %1555 = vrot.lane.b32.xlu0 %v1498, 2
        %v1556 = vpop.permute.xlu0 %1555
        %1557 = vrot.lane.b32.xlu0 %v1495, 2
        %v1558 = vpop.permute.xlu0 %1557
        %1559 = vrot.lane.b32.xlu0 %v1499, 2
        %v1560 = vpop.permute.xlu0 %1559
        %1561 = vrot.lane.b32.xlu0 %v1501, 2
        %v1562 = vpop.permute.xlu0 %1561
        %1563 = vrot.lane.b32.xlu0 %v1508, 2
        %v1564 = vpop.permute.xlu0 %1563
        %1565 = vrot.lane.b32.xlu0 %v1505, 2
        %v1566 = vpop.permute.xlu0 %1565
        %1567 = vrot.lane.b32.xlu0 %v1509, 2
        %v1568 = vpop.permute.xlu0 %1567
        %v1569 = vsel %vm511, %v1534, %v1536
        %v1570 = vsel %vm511, %v1538, %v1540
        %v1571 = vsel %vm511, %v1542, %v1544
        %v1572 = vsel %vm511, %v1546, %v1548
        %v1573 = vsel %vm511, %v1554, %v1556
        %v1574 = vsel %vm511, %v1558, %v1560
        %v1575 = vsel %vm511, %v1562, %v1564
        %v1576 = vsel %vm511, %v1566, %v1568
        %v1588 = vsel %vm796, %v1531, 0
        %1590 = vmatprep.subr.bf16.mxu0 0
        %1591 = vmatpush1.bf16.msra.mxu0 %v1574
        %1592 = vmatprep.subr.bf16.mxu0 0
        %1593 = vmatpush1.bf16.msra.mxu0 %v1573
        %1594 = vmatprep.subr.bf16.mxu0 0
        %1595 = vmatpush1.bf16.msra.mxu0 %v1552
        %1596 = vmatprep.subr.bf16.mxu0 0
        %1597 = vmatpush1.bf16.msra.mxu0 %v1550
        %1598 = vmatprep.subr.bf16.mxu0 0
        %1599 = vmatpush1.bf16.msra.mxu0 %v1572
        %1600 = vmatprep.subr.bf16.mxu0 0
        %1601 = vmatpush1.bf16.msra.mxu0 %v1571
        %1602 = vmatprep.subr.bf16.mxu0 0
        %1603 = vmatpush1.bf16.msra.mxu0 %v1570
        %1604 = vmatprep.subr.bf16.mxu0 0
        %1605 = vmatpush1.bf16.msra.mxu0 %v1569
        %1606 = vmatprep.subr.bf16.mxu0 0
        %1607 = vmatpush2.bf16.msra.mxu0 0
        %1608 = vmatprep.subr.bf16.mxu0 0
        %1609 = vmatpush2.bf16.msra.mxu0 0
        %1610 = vmatprep.subr.bf16.mxu0 0
        %1611 = vmatpush2.bf16.msra.mxu0 0
        %1612 = vmatprep.subr.bf16.mxu0 0
        %1613 = vmatpush2.bf16.msra.mxu0 0
        %1614 = vmatprep.subr.bf16.mxu0 0
        %1615 = vmatpush2.bf16.msra.mxu0 0
        %1616 = vmatprep.subr.bf16.mxu0 0
        %1617 = vmatpush2.bf16.msra.mxu0 0
        %1618 = vmatprep.subr.bf16.mxu0 0
        %1619 = vmatpush2.bf16.msra.mxu0 %v1576
        %1620 = vmatprep.subr.bf16.mxu0 0
        %1621 = vmatpush2.bf16.msra.mxu0 %v1575
        %1622 = vmatprep.mubr.bf16.mxu0 %v1588
        %1623 = vmatmul.mubr.bf16.gmra.mxu0 %v1530
        %v1624 = vpop.f32.mrf.mxu0
        %v1625 = vadd.f32 %v1517, %v1624
        %v1626 = vpop.f32.mrf.mxu0
        %v1627 = vpop.f32.mrf.mxu0
        %v1628 = vadd.f32 %v1522, %v1627
        %v1629 = vpop.f32.mrf.mxu0
        %1630 = vdwg.mxu0
        %1631 = vst [vmem:[%s379] sm:$0xff] %v1625
        %1632 = vst [vmem:[%s379 + $0x8] sm:$0xff] %v1628
        %s1633 = sand.u32 %s269, 1
        %s1634 = scalar_lea.sflag [#allocation4], %s1633
        %s1635 = sand.u32 %s269, 1
        %s1636 = smul.addr %s1635, 16
        %s1637 = scalar_lea.vmem [#allocation3], %s1636
        // Predicated region
        $region65: #{tpu_custom_call.1} parent=63 // pred_check
          %p1638 = pneg %p279
        $region66: #{tpu_custom_call.1} parent=63 // pred_check_branch
          %1640 = sbr.rel (%p1638) target = $region68
        $region67: #{tpu_custom_call.1} parent=63 // pred_region
          %s1642 = ssub.s32 256, 256
          %1643 = vsyncadd %s1634, %s1642
          %s1644 = smul.addr %s25, 2
          %s1645 = smul.addr %s1644, 128
          %s1646 = scalar_lea.hbm %s11, %s1645
          %s1647 = sshll.u32 %s1637, 4
          %s1648 = int_to_ptr.vmem [resolvable:$true] %s1647
          %1653 = dma.vmem_to_hbm [thread:$0]  %s1648, 256, %s1646, %s1634, 128, 128, 8
        $region68: #{tpu_custom_call.1} parent=63 // pred_fallthru
          _
      $region64: #{tpu_custom_call.1} parent=5 // pred_fallthru
        _
      %p1654 = scmp.le.s32.totalorder 2, %s20
      // Predicated region
      $region69: #{tpu_custom_call.1} parent=5 // pred_check
        %p1655 = pneg %p1654
      $region70: #{tpu_custom_call.1} parent=5 // pred_check_branch
        %1657 = sbr.rel (%p1655) target = $region72
      $region71: #{tpu_custom_call.1} parent=5 // pred_region
        %s1658 = ssub.s32 %s20, 2
        // Predicated region
        $region73: #{tpu_custom_call.1} parent=71 // pred_check
          %p1659 = pneg %p285
        $region74: #{tpu_custom_call.1} parent=71 // pred_check_branch
          %1661 = sbr.rel (%p1659) target = $region76
        $region75: #{tpu_custom_call.1} parent=71 // pred_region
          %s1662 = sand.u32 %s270, 1
          %s1663 = scalar_lea.sflag [#allocation4], %s1662
          %s1664 = sand.u32 %s270, 1
          %s1665 = smul.addr %s1664, 16
          %s1666 = scalar_lea.vmem [#allocation3], %s1665
          %1667 = dma.done %s1663, 256
        $region76: #{tpu_custom_call.1} parent=71 // pred_fallthru
          _
      $region72: #{tpu_custom_call.1} parent=5 // pred_fallthru
        _
    $region6: #{tpu_custom_call.1} parent=1 // loop_footer
      %s24 = sadd.s32 1, %s20
    $region7: #{tpu_custom_call.1} parent=1 // loop_footer_branch
      %19 = sbr.rel target = $region3
    $region8: #{tpu_custom_call.1} parent=1 // loop_exit
      _
    %1668 = vsyncpa [#allocation4], 1
    %s1669 = scalar_lea.sflag [#allocation4], 1
    %1670 = vsyncpa %s1669, 1

</llo_original>
